<compile_context>
chip_gen: v6e
topology: v6e:2x2x1
jax: 0.10.0
libtpu: 0.0.40
codegen_flags: <defaults>
</compile_context>

<pallas_src>
import math

import jax
import jax.numpy as jnp
from jax import lax
from jax.experimental import pallas as pl
from jax.experimental.pallas import tpu as pltpu


def _round_up(x, m):
    return ((x + m - 1) // m) * m


def _mlp_kernel(x_ref,
                w1_ref, b1_ref,
                w2_ref, b2_ref,
                w3_ref, b3_ref,
                w4_ref, b4_ref,
                o_ref):
    """Fused transposed MLP on one batch tile.

    Activations are (features, block_m): batch lives on lanes, so the final
    (1, block_m) output is lane-dense. MXU operands are bf16, accumulation
    and elementwise math are f32.
    """
    x_bf = x_ref[...].astype(jnp.bfloat16)                     # (block_m, in)

    # h1 = relu(W1 @ x^T + b1)  -> (256, block_m)
    h = lax.dot_general(w1_ref[...], x_bf,
                        (((1,), (1,)), ((), ())),
                        preferred_element_type=jnp.float32)
    h = jnp.maximum(h + b1_ref[...], 0.0)

    # h2 = relu(W2 @ h1 + b2)   -> (512, block_m)
    h = jnp.dot(w2_ref[...], h.astype(jnp.bfloat16),
                preferred_element_type=jnp.float32)
    h = jnp.maximum(h + b2_ref[...], 0.0)

    # h3 = relu(W3 @ h2 + b3)   -> (256, block_m)
    h = jnp.dot(w3_ref[...], h.astype(jnp.bfloat16),
                preferred_element_type=jnp.float32)
    h = jnp.maximum(h + b3_ref[...], 0.0)

    # Final 256 -> 1 layer: VPU multiply + sublane reduce (no MXU push),
    # result is already lane-dense (1, block_m).
    z = jnp.sum(h * w4_ref[...], axis=0, keepdims=True) + b4_ref[...]

    # Sigmoid: exp and approx reciprocal both ride the EUP slot.
    o_ref[...] = pl.reciprocal(1.0 + jnp.exp(-z), approx=True).astype(o_ref.dtype)


def fair_weigh_net_forward(x, params, *, block_m=512):
    """FairWeighNet forward. x: (batch, input_size) f32 -> (batch,) f32.

    params: list of (W, b) in PyTorch nn.Linear layout: W (out, in), b (out,).
    """
    (w1, b1), (w2, b2), (w3, b3), (w4, b4) = params
    batch, input_size = x.shape

    # Batch tile: multiple of 128 lanes, clamped to the padded batch.
    block_m = max(128, _round_up(block_m, 128))
    block_m = min(block_m, _round_up(batch, 128))
    padded = _round_up(batch, block_m)
    if padded != batch:
        x = jnp.pad(x, ((0, padded - batch), (0, 0)))

    # bf16 MXU operands (cast once); biases and the final weight column in f32.
    w1b = w1.astype(jnp.bfloat16)                     # (256, in)
    w2b = w2.astype(jnp.bfloat16)                     # (512, 256)
    w3b = w3.astype(jnp.bfloat16)                     # (256, 512)
    w4c = w4.reshape(-1, 1).astype(jnp.float32)       # (256, 1)
    b1c = b1.reshape(-1, 1).astype(jnp.float32)       # (256, 1)
    b2c = b2.reshape(-1, 1).astype(jnp.float32)       # (512, 1)
    b3c = b3.reshape(-1, 1).astype(jnp.float32)       # (256, 1)
    b4c = b4.reshape(1, 1).astype(jnp.float32)        # (1, 1)

    full = lambda a: pl.BlockSpec(a.shape, lambda i: (0, 0))

    out = pl.pallas_call(
        _mlp_kernel,
        out_shape=jax.ShapeDtypeStruct((1, padded), jnp.float32),
        grid_spec=pltpu.PrefetchScalarGridSpec(
            num_scalar_prefetch=0,
            grid=(padded // block_m,),
            in_specs=[
                pl.BlockSpec((block_m, input_size), lambda i: (i, 0)),
                full(w1b), full(b1c),
                full(w2b), full(b2c),
                full(w3b), full(b3c),
                full(w4c), full(b4c),
            ],
            out_specs=pl.BlockSpec((1, block_m), lambda i: (0, i)),
        ),
        compiler_params=pltpu.CompilerParams(
            dimension_semantics=("parallel",)),
    )(x, w1b, b1c, w2b, b2c, w3b, b3c, w4c, b4c)

    return out[0, :batch]  # drop padding, squeeze -> (batch,)


def init_params(key, input_size, dense_sizes=(256, 512, 256)):
    """Deterministic init matching nn.Linear layout: W (out, in), b (out,)."""
    sizes = [input_size] + list(dense_sizes) + [1]
    params = []
    for i in range(len(sizes) - 1):
        fan_in, fan_out = sizes[i], sizes[i + 1]
        key, wk, bk = jax.random.split(key, 3)
        bound = 1.0 / math.sqrt(fan_in)
        w = jax.random.uniform(wk, (fan_out, fan_in), jnp.float32, -bound, bound)
        b = jax.random.uniform(bk, (fan_out,), jnp.float32, -bound, bound)
        params.append((w, b))
    return params


def reference_forward(x, params):
    """Pure-JAX f32 reference of the PyTorch module."""
    h = x
    for i, (w, b) in enumerate(params):
        h = h @ w.T + b
        if i < len(params) - 1:
            h = jnp.maximum(h, 0.0)
    return jax.nn.sigmoid(h[:, 0])


if __name__ == "__main__":
    key = jax.random.PRNGKey(0)
    batch, input_size = 16, 32

    key, xk = jax.random.split(key)
    x = jax.random.normal(xk, (batch, input_size), jnp.float32)
    params = init_params(key, input_size)

    out = jax.block_until_ready(fair_weigh_net_forward(x, params))
    ref = reference_forward(x, params)

    assert out.shape == (batch,), out.shape
    # bf16 matmul operands + approx reciprocal -> loosened tolerance vs f32 ref
    assert jnp.allclose(out, ref, atol=2e-2, rtol=2e-2), (out, ref)

    print("KERNEL_OK")
</pallas_src>

<mosaic_0001>
module attributes {stable_mosaic.version = 11 : i64} {
  func.func @_mlp_kernel(%arg0: i32, %arg1: memref<128x32xf32, #tpu.memory_space<vmem>>, %arg2: memref<256x32xbf16, #tpu.memory_space<vmem>>, %arg3: memref<256x1xf32, #tpu.memory_space<vmem>>, %arg4: memref<512x256xbf16, #tpu.memory_space<vmem>>, %arg5: memref<512x1xf32, #tpu.memory_space<vmem>>, %arg6: memref<256x512xbf16, #tpu.memory_space<vmem>>, %arg7: memref<256x1xf32, #tpu.memory_space<vmem>>, %arg8: memref<256x1xf32, #tpu.memory_space<vmem>>, %arg9: memref<1x1xf32, #tpu.memory_space<vmem>>, %arg10: memref<1x128xf32, #tpu.memory_space<vmem>>) attributes {dimension_semantics = [#tpu.dimension_semantics<parallel>], iteration_bounds = array<i64: 1>, scalar_prefetch = 0 : i64, scratch_operands = 0 : i64, tpu.core_type = #tpu.core_type<tc>, window_params = [{transform_indices = @transform_0, window_bounds = array<i64: 128, 32>}, {pipeline_mode = #tpu.pipeline_mode<synchronous>, transform_indices = @transform_1, window_bounds = array<i64: 256, 32>}, {pipeline_mode = #tpu.pipeline_mode<synchronous>, transform_indices = @transform_2, window_bounds = array<i64: 256, 1>}, {pipeline_mode = #tpu.pipeline_mode<synchronous>, transform_indices = @transform_3, window_bounds = array<i64: 512, 256>}, {pipeline_mode = #tpu.pipeline_mode<synchronous>, transform_indices = @transform_4, window_bounds = array<i64: 512, 1>}, {pipeline_mode = #tpu.pipeline_mode<synchronous>, transform_indices = @transform_5, window_bounds = array<i64: 256, 512>}, {pipeline_mode = #tpu.pipeline_mode<synchronous>, transform_indices = @transform_6, window_bounds = array<i64: 256, 1>}, {pipeline_mode = #tpu.pipeline_mode<synchronous>, transform_indices = @transform_7, window_bounds = array<i64: 256, 1>}, {pipeline_mode = #tpu.pipeline_mode<synchronous>, transform_indices = @transform_8, window_bounds = array<i64: 1, 1>}, {transform_indices = @transform_9, window_bounds = array<i64: 1, 128>}]} {
    %c0 = arith.constant 0 : index
    %c0_0 = arith.constant 0 : index
    %0 = vector.load %arg1[%c0, %c0_0] : memref<128x32xf32, #tpu.memory_space<vmem>>, vector<128x32xf32>
    %1 = arith.truncf %0 : vector<128x32xf32> to vector<128x32xbf16>
    %c0_1 = arith.constant 0 : index
    %c0_2 = arith.constant 0 : index
    %2 = vector.load %arg2[%c0_1, %c0_2] : memref<256x32xbf16, #tpu.memory_space<vmem>>, vector<256x32xbf16>
    %cst = arith.constant dense<0.000000e+00> : vector<256x128xf32>
    %3 = tpu.matmul %2, %1, %cst {dimension_numbers = #tpu.dot_dimension_numbers<[1], [1], [0], [0], [0, 0, 1, 0], [], []>} : vector<256x32xbf16>, vector<128x32xbf16>, vector<256x128xf32> -> vector<256x128xf32>
    %c0_3 = arith.constant 0 : index
    %c0_4 = arith.constant 0 : index
    %4 = vector.load %arg3[%c0_3, %c0_4] : memref<256x1xf32, #tpu.memory_space<vmem>>, vector<256x1xf32>
    %5 = vector.broadcast %4 : vector<256x1xf32> to vector<256x128xf32>
    %6 = arith.addf %3, %5 : vector<256x128xf32>
    %cst_5 = arith.constant 0.000000e+00 : f32
    %7 = vector.broadcast %cst_5 : f32 to vector<256x128xf32>
    %8 = arith.maximumf %6, %7 : vector<256x128xf32>
    %c0_6 = arith.constant 0 : index
    %c0_7 = arith.constant 0 : index
    %9 = vector.load %arg4[%c0_6, %c0_7] : memref<512x256xbf16, #tpu.memory_space<vmem>>, vector<512x256xbf16>
    %10 = arith.truncf %8 : vector<256x128xf32> to vector<256x128xbf16>
    %cst_8 = arith.constant dense<0.000000e+00> : vector<512x128xf32>
    %11 = tpu.matmul %9, %10, %cst_8 {dimension_numbers = #tpu.dot_dimension_numbers<[1], [0], [0], [1], [0, 0, 1, 1], [], []>} : vector<512x256xbf16>, vector<256x128xbf16>, vector<512x128xf32> -> vector<512x128xf32>
    %c0_9 = arith.constant 0 : index
    %c0_10 = arith.constant 0 : index
    %12 = vector.load %arg5[%c0_9, %c0_10] : memref<512x1xf32, #tpu.memory_space<vmem>>, vector<512x1xf32>
    %13 = vector.broadcast %12 : vector<512x1xf32> to vector<512x128xf32>
    %14 = arith.addf %11, %13 : vector<512x128xf32>
    %cst_11 = arith.constant 0.000000e+00 : f32
    %15 = vector.broadcast %cst_11 : f32 to vector<512x128xf32>
    %16 = arith.maximumf %14, %15 : vector<512x128xf32>
    %c0_12 = arith.constant 0 : index
    %c0_13 = arith.constant 0 : index
    %17 = vector.load %arg6[%c0_12, %c0_13] : memref<256x512xbf16, #tpu.memory_space<vmem>>, vector<256x512xbf16>
    %18 = arith.truncf %16 : vector<512x128xf32> to vector<512x128xbf16>
    %cst_14 = arith.constant dense<0.000000e+00> : vector<256x128xf32>
    %19 = tpu.matmul %17, %18, %cst_14 {dimension_numbers = #tpu.dot_dimension_numbers<[1], [0], [0], [1], [0, 0, 1, 1], [], []>} : vector<256x512xbf16>, vector<512x128xbf16>, vector<256x128xf32> -> vector<256x128xf32>
    %c0_15 = arith.constant 0 : index
    %c0_16 = arith.constant 0 : index
    %20 = vector.load %arg7[%c0_15, %c0_16] : memref<256x1xf32, #tpu.memory_space<vmem>>, vector<256x1xf32>
    %21 = vector.broadcast %20 : vector<256x1xf32> to vector<256x128xf32>
    %22 = arith.addf %19, %21 : vector<256x128xf32>
    %cst_17 = arith.constant 0.000000e+00 : f32
    %23 = vector.broadcast %cst_17 : f32 to vector<256x128xf32>
    %24 = arith.maximumf %22, %23 : vector<256x128xf32>
    %c0_18 = arith.constant 0 : index
    %c0_19 = arith.constant 0 : index
    %25 = vector.load %arg8[%c0_18, %c0_19] : memref<256x1xf32, #tpu.memory_space<vmem>>, vector<256x1xf32>
    %26 = vector.broadcast %25 : vector<256x1xf32> to vector<256x128xf32>
    %27 = arith.mulf %24, %26 : vector<256x128xf32>
    %cst_20 = arith.constant dense<0.000000e+00> : vector<128xf32>
    %28 = vector.multi_reduction <add>, %27, %cst_20 [0] : vector<256x128xf32> to vector<128xf32>
    %29 = vector.shape_cast %28 : vector<128xf32> to vector<1x128xf32>
    %c0_21 = arith.constant 0 : index
    %c0_22 = arith.constant 0 : index
    %30 = vector.load %arg9[%c0_21, %c0_22] : memref<1x1xf32, #tpu.memory_space<vmem>>, vector<1x1xf32>
    %31 = vector.broadcast %30 : vector<1x1xf32> to vector<1x128xf32>
    %32 = arith.addf %29, %31 : vector<1x128xf32>
    %cst_23 = arith.constant 0.000000e+00 : f32
    %33 = vector.broadcast %cst_23 : f32 to vector<1x128xf32>
    %34 = arith.subf %33, %32 : vector<1x128xf32>
    %35 = math.exp %34 : vector<1x128xf32>
    %cst_24 = arith.constant 1.000000e+00 : f32
    %36 = vector.broadcast %cst_24 : f32 to vector<1x128xf32>
    %37 = arith.addf %36, %35 : vector<1x128xf32>
    %38 = tpu.reciprocal %37 {approx = true} : vector<1x128xf32> -> vector<1x128xf32>
    %c0_25 = arith.constant 0 : index
    %c0_26 = arith.constant 0 : index
    %39 = vector.load %arg10[%c0_25, %c0_26] : memref<1x128xf32, #tpu.memory_space<vmem>>, vector<1x128xf32>
    tpu.vector_store %arg10[%c0_25, %c0_26], %38 {strides = array<i32>} : memref<1x128xf32, #tpu.memory_space<vmem>>, vector<1x128xf32>,
    return
  }
  func.func @transform_0(%arg0: i32) -> (i32, i32) {
    %c0_i32 = arith.constant 0 : i32
    %c0_i32_0 = arith.constant 0 : i32
    return %arg0, %c0_i32 : i32, i32
  }
  func.func @transform_1(%arg0: i32) -> (i32, i32) {
    %c0_i32 = arith.constant 0 : i32
    %c0_i32_0 = arith.constant 0 : i32
    %c0_i32_1 = arith.constant 0 : i32
    return %c0_i32, %c0_i32_0 : i32, i32
  }
  func.func @transform_2(%arg0: i32) -> (i32, i32) {
    %c0_i32 = arith.constant 0 : i32
    %c0_i32_0 = arith.constant 0 : i32
    %c0_i32_1 = arith.constant 0 : i32
    return %c0_i32, %c0_i32_0 : i32, i32
  }
  func.func @transform_3(%arg0: i32) -> (i32, i32) {
    %c0_i32 = arith.constant 0 : i32
    %c0_i32_0 = arith.constant 0 : i32
    %c0_i32_1 = arith.constant 0 : i32
    return %c0_i32, %c0_i32_0 : i32, i32
  }
  func.func @transform_4(%arg0: i32) -> (i32, i32) {
    %c0_i32 = arith.constant 0 : i32
    %c0_i32_0 = arith.constant 0 : i32
    %c0_i32_1 = arith.constant 0 : i32
    return %c0_i32, %c0_i32_0 : i32, i32
  }
  func.func @transform_5(%arg0: i32) -> (i32, i32) {
    %c0_i32 = arith.constant 0 : i32
    %c0_i32_0 = arith.constant 0 : i32
    %c0_i32_1 = arith.constant 0 : i32
    return %c0_i32, %c0_i32_0 : i32, i32
  }
  func.func @transform_6(%arg0: i32) -> (i32, i32) {
    %c0_i32 = arith.constant 0 : i32
    %c0_i32_0 = arith.constant 0 : i32
    %c0_i32_1 = arith.constant 0 : i32
    return %c0_i32, %c0_i32_0 : i32, i32
  }
  func.func @transform_7(%arg0: i32) -> (i32, i32) {
    %c0_i32 = arith.constant 0 : i32
    %c0_i32_0 = arith.constant 0 : i32
    %c0_i32_1 = arith.constant 0 : i32
    return %c0_i32, %c0_i32_0 : i32, i32
  }
  func.func @transform_8(%arg0: i32) -> (i32, i32) {
    %c0_i32 = arith.constant 0 : i32
    %c0_i32_0 = arith.constant 0 : i32
    %c0_i32_1 = arith.constant 0 : i32
    return %c0_i32, %c0_i32_0 : i32, i32
  }
  func.func @transform_9(%arg0: i32) -> (i32, i32) {
    %c0_i32 = arith.constant 0 : i32
    %c0_i32_0 = arith.constant 0 : i32
    return %c0_i32, %arg0 : i32, i32
  }
}

</mosaic_0001>

<llo_original>
// kernel: tpu_custom_call.1
$region0: #{tpu_custom_call.1}
  #allocation0 [shape = 'u32[]', space=smem, size = 0x4, offset = 0x4, fixed_abs, tag = 'smem constant byte address 0x4 - core index']
  #allocation1 [shape = 'u32[144,128]{1,0:T(1,128)}', space=vmem, size = 0x12000, scoped, tag = 'internal scratch']
  #allocation2 [shape = 'f32[1,1]{1,0:T(1,128)S(1)}', space=vmem, size = 0x200, scoped, tag = 'scoped memory for tpu_custom_call.1']
  %s0 = inlined_call_operand.vmem [shape: f32[128,32], index: 0, kind: input, shape index: {}]
  %s1 = inlined_call_operand.vmem [shape: bf16[256,32], index: 1, kind: input, shape index: {}]
  %s2 = inlined_call_operand.vmem [shape: f32[256,1], index: 2, kind: input, shape index: {}]
  %s3 = inlined_call_operand.vmem [shape: bf16[512,256], index: 3, kind: input, shape index: {}]
  %s4 = inlined_call_operand.vmem [shape: f32[512,1], index: 4, kind: input, shape index: {}]
  %s5 = inlined_call_operand.vmem [shape: bf16[256,512], index: 5, kind: input, shape index: {}]
  %s6 = inlined_call_operand.vmem [shape: f32[256,1], index: 6, kind: input, shape index: {}]
  %s7 = inlined_call_operand.vmem [shape: f32[256,1], index: 7, kind: input, shape index: {}]
  %s8 = inlined_call_operand.<no memory space> [shape: f32[1,1], index: 8, kind: input, shape index: {}]
  %s9 = inlined_call_operand.hbm [shape: f32[1,128], index: 9, kind: output, shape index: {}]
  %s10 = sld [smem:[#allocation0]]
  $region46: #{tpu_custom_call.1} parent=0
    _
  %s12 = ssub.s32 1, %s10
  %s13 = scalar_select 0, %s12, %s10
  %v14 = vstv %s8
  %15 = vst [vmem:[#allocation2] sm:$0x1] %v14
  $region1: #{tpu_custom_call.1} parent=0
    #allocation3 [shape = 'u8[512]{0}', space=vmem, size = 0x400, scoped, tag = 'output window, operand 0, single buffered']
    #allocation4 [shape = 's32[1]{0}', space=sflag, size = 0x4, scoped, tag = 'scoped memory for tpu_custom_call.1']
    %16 = vsyncpa [#allocation4], 0
    // Predicated region
    $region2: #{tpu_custom_call.1} parent=1 // pred_check
      _
    $region3: #{tpu_custom_call.1} parent=1 // pred_check_branch
      %18 = sbr.rel (0) target = $region5
    $region4: #{tpu_custom_call.1} parent=1 // pred_region
      _
    $region5: #{tpu_custom_call.1} parent=1 // pred_fallthru
      _
    // Predicated region
    $region6: #{tpu_custom_call.1} parent=1 // pred_check
      _
    $region7: #{tpu_custom_call.1} parent=1 // pred_check_branch
      %20 = sbr.rel (0) target = $region9
    $region8: #{tpu_custom_call.1} parent=1 // pred_region
      _
    $region9: #{tpu_custom_call.1} parent=1 // pred_fallthru
      _
    // Predicated region
    $region10: #{tpu_custom_call.1} parent=1 // pred_check
      _
    $region11: #{tpu_custom_call.1} parent=1 // pred_check_branch
      %22 = sbr.rel (0) target = $region13
    $region12: #{tpu_custom_call.1} parent=1 // pred_region
      _
    $region13: #{tpu_custom_call.1} parent=1 // pred_fallthru
      _
    // Predicated region
    $region14: #{tpu_custom_call.1} parent=1 // pred_check
      _
    $region15: #{tpu_custom_call.1} parent=1 // pred_check_branch
      %24 = sbr.rel (0) target = $region17
    $region16: #{tpu_custom_call.1} parent=1 // pred_region
      _
    $region17: #{tpu_custom_call.1} parent=1 // pred_fallthru
      _
    // Predicated region
    $region18: #{tpu_custom_call.1} parent=1 // pred_check
      _
    $region19: #{tpu_custom_call.1} parent=1 // pred_check_branch
      %26 = sbr.rel (0) target = $region21
    $region20: #{tpu_custom_call.1} parent=1 // pred_region
      _
    $region21: #{tpu_custom_call.1} parent=1 // pred_fallthru
      _
    // Predicated region
    $region22: #{tpu_custom_call.1} parent=1 // pred_check
      _
    $region23: #{tpu_custom_call.1} parent=1 // pred_check_branch
      %28 = sbr.rel (0) target = $region25
    $region24: #{tpu_custom_call.1} parent=1 // pred_region
      _
    $region25: #{tpu_custom_call.1} parent=1 // pred_fallthru
      _
    // Predicated region
    $region26: #{tpu_custom_call.1} parent=1 // pred_check
      _
    $region27: #{tpu_custom_call.1} parent=1 // pred_check_branch
      %30 = sbr.rel (0) target = $region29
    $region28: #{tpu_custom_call.1} parent=1 // pred_region
      _
    $region29: #{tpu_custom_call.1} parent=1 // pred_fallthru
      _
    // Predicated region
    $region30: #{tpu_custom_call.1} parent=1 // pred_check
      _
    $region31: #{tpu_custom_call.1} parent=1 // pred_check_branch
      %32 = sbr.rel (0) target = $region33
    $region32: #{tpu_custom_call.1} parent=1 // pred_region
      _
    $region33: #{tpu_custom_call.1} parent=1 // pred_fallthru
      _
    // Predicated region
    $region34: #{tpu_custom_call.1} parent=1 // pred_check
      _
    $region35: #{tpu_custom_call.1} parent=1 // pred_check_branch
      %34 = sbr.rel (0) target = $region37
    $region36: #{tpu_custom_call.1} parent=1 // pred_region
      _
    $region37: #{tpu_custom_call.1} parent=1 // pred_fallthru
      _
    %v36 = vld [vmem:[%s0] sm:$0xff]
    %v37 = vld [vmem:[%s0 + $0x8] sm:$0xff]
    %v38 = vld [vmem:[%s0 + $0x10] sm:$0xff]
    %v39 = vld [vmem:[%s0 + $0x18] sm:$0xff]
    %v40 = vld [vmem:[%s0 + $0x20] sm:$0xff]
    %v41 = vld [vmem:[%s0 + $0x28] sm:$0xff]
    %v42 = vld [vmem:[%s0 + $0x30] sm:$0xff]
    %v43 = vld [vmem:[%s0 + $0x38] sm:$0xff]
    %v44 = vld [vmem:[%s0 + $0x40] sm:$0xff]
    %v45 = vld [vmem:[%s0 + $0x48] sm:$0xff]
    %v46 = vld [vmem:[%s0 + $0x50] sm:$0xff]
    %v47 = vld [vmem:[%s0 + $0x58] sm:$0xff]
    %v48 = vld [vmem:[%s0 + $0x60] sm:$0xff]
    %v49 = vld [vmem:[%s0 + $0x68] sm:$0xff]
    %v50 = vld [vmem:[%s0 + $0x70] sm:$0xff]
    %v51 = vld [vmem:[%s0 + $0x78] sm:$0xff]
    %v52 = vpack.c.bf16 %v37, %v36
    %v53 = vpack.c.bf16 %v39, %v38
    %v54 = vpack.c.bf16 %v41, %v40
    %v55 = vpack.c.bf16 %v43, %v42
    %v56 = vpack.c.bf16 %v45, %v44
    %v57 = vpack.c.bf16 %v47, %v46
    %v58 = vpack.c.bf16 %v49, %v48
    %v59 = vpack.c.bf16 %v51, %v50
    %v60 = vld [vmem:[%s1] sm:$0xf]
    %v61 = vld [vmem:[%s1 + $0x4] sm:$0xf]
    %v62 = vld [vmem:[%s1 + $0x8] sm:$0xf]
    %v63 = vld [vmem:[%s1 + $0xc] sm:$0xf]
    %v64 = vld [vmem:[%s1 + $0x10] sm:$0xf]
    %v65 = vld [vmem:[%s1 + $0x14] sm:$0xf]
    %v66 = vld [vmem:[%s1 + $0x18] sm:$0xf]
    %v67 = vld [vmem:[%s1 + $0x1c] sm:$0xf]
    %v68 = vld [vmem:[%s1 + $0x20] sm:$0xf]
    %v69 = vld [vmem:[%s1 + $0x24] sm:$0xf]
    %v70 = vld [vmem:[%s1 + $0x28] sm:$0xf]
    %v71 = vld [vmem:[%s1 + $0x2c] sm:$0xf]
    %v72 = vld [vmem:[%s1 + $0x30] sm:$0xf]
    %v73 = vld [vmem:[%s1 + $0x34] sm:$0xf]
    %v74 = vld [vmem:[%s1 + $0x38] sm:$0xf]
    %v75 = vld [vmem:[%s1 + $0x3c] sm:$0xf]
    %v76 = vld [vmem:[%s1 + $0x40] sm:$0xf]
    %v77 = vld [vmem:[%s1 + $0x44] sm:$0xf]
    %v78 = vld [vmem:[%s1 + $0x48] sm:$0xf]
    %v79 = vld [vmem:[%s1 + $0x4c] sm:$0xf]
    %v80 = vld [vmem:[%s1 + $0x50] sm:$0xf]
    %v81 = vld [vmem:[%s1 + $0x54] sm:$0xf]
    %v82 = vld [vmem:[%s1 + $0x58] sm:$0xf]
    %v83 = vld [vmem:[%s1 + $0x5c] sm:$0xf]
    %v84 = vld [vmem:[%s1 + $0x60] sm:$0xf]
    %v85 = vld [vmem:[%s1 + $0x64] sm:$0xf]
    %v86 = vld [vmem:[%s1 + $0x68] sm:$0xf]
    %v87 = vld [vmem:[%s1 + $0x6c] sm:$0xf]
    %v88 = vld [vmem:[%s1 + $0x70] sm:$0xf]
    %v89 = vld [vmem:[%s1 + $0x74] sm:$0xf]
    %v90 = vld [vmem:[%s1 + $0x78] sm:$0xf]
    %v91 = vld [vmem:[%s1 + $0x7c] sm:$0xf]
    %v92 = vld [vmem:[%s2] sm:$0xff]
    %v93 = vld [vmem:[%s2 + $0x8] sm:$0xff]
    %v94 = vld [vmem:[%s2 + $0x10] sm:$0xff]
    %v95 = vld [vmem:[%s2 + $0x18] sm:$0xff]
    %v96 = vld [vmem:[%s2 + $0x20] sm:$0xff]
    %v97 = vld [vmem:[%s2 + $0x28] sm:$0xff]
    %v98 = vld [vmem:[%s2 + $0x30] sm:$0xff]
    %v99 = vld [vmem:[%s2 + $0x38] sm:$0xff]
    %v100 = vld [vmem:[%s2 + $0x40] sm:$0xff]
    %v101 = vld [vmem:[%s2 + $0x48] sm:$0xff]
    %v102 = vld [vmem:[%s2 + $0x50] sm:$0xff]
    %v103 = vld [vmem:[%s2 + $0x58] sm:$0xff]
    %v104 = vld [vmem:[%s2 + $0x60] sm:$0xff]
    %v105 = vld [vmem:[%s2 + $0x68] sm:$0xff]
    %v106 = vld [vmem:[%s2 + $0x70] sm:$0xff]
    %v107 = vld [vmem:[%s2 + $0x78] sm:$0xff]
    %v108 = vld [vmem:[%s2 + $0x80] sm:$0xff]
    %v109 = vld [vmem:[%s2 + $0x88] sm:$0xff]
    %v110 = vld [vmem:[%s2 + $0x90] sm:$0xff]
    %v111 = vld [vmem:[%s2 + $0x98] sm:$0xff]
    %v112 = vld [vmem:[%s2 + $0xa0] sm:$0xff]
    %v113 = vld [vmem:[%s2 + $0xa8] sm:$0xff]
    %v114 = vld [vmem:[%s2 + $0xb0] sm:$0xff]
    %v115 = vld [vmem:[%s2 + $0xb8] sm:$0xff]
    %v116 = vld [vmem:[%s2 + $0xc0] sm:$0xff]
    %v117 = vld [vmem:[%s2 + $0xc8] sm:$0xff]
    %v118 = vld [vmem:[%s2 + $0xd0] sm:$0xff]
    %v119 = vld [vmem:[%s2 + $0xd8] sm:$0xff]
    %v120 = vld [vmem:[%s2 + $0xe0] sm:$0xff]
    %v121 = vld [vmem:[%s2 + $0xe8] sm:$0xff]
    %v122 = vld [vmem:[%s2 + $0xf0] sm:$0xff]
    %v123 = vld [vmem:[%s2 + $0xf8] sm:$0xff]
    %125 = vset.pattern.permute.xlu0 0
    %126 = vperm.xlu0 %125, %v92
    %v127 = vpop.permute.xlu0 %126
    %130 = vset.pattern.permute.xlu0 0
    %131 = vperm.xlu0 %130, %v93
    %v132 = vpop.permute.xlu0 %131
    %135 = vset.pattern.permute.xlu0 0
    %136 = vperm.xlu0 %135, %v94
    %v137 = vpop.permute.xlu0 %136
    %140 = vset.pattern.permute.xlu0 0
    %141 = vperm.xlu0 %140, %v95
    %v142 = vpop.permute.xlu0 %141
    %145 = vset.pattern.permute.xlu0 0
    %146 = vperm.xlu0 %145, %v96
    %v147 = vpop.permute.xlu0 %146
    %150 = vset.pattern.permute.xlu0 0
    %151 = vperm.xlu0 %150, %v97
    %v152 = vpop.permute.xlu0 %151
    %155 = vset.pattern.permute.xlu0 0
    %156 = vperm.xlu0 %155, %v98
    %v157 = vpop.permute.xlu0 %156
    %160 = vset.pattern.permute.xlu0 0
    %161 = vperm.xlu0 %160, %v99
    %v162 = vpop.permute.xlu0 %161
    %165 = vset.pattern.permute.xlu0 0
    %166 = vperm.xlu0 %165, %v100
    %v167 = vpop.permute.xlu0 %166
    %170 = vset.pattern.permute.xlu0 0
    %171 = vperm.xlu0 %170, %v101
    %v172 = vpop.permute.xlu0 %171
    %175 = vset.pattern.permute.xlu0 0
    %176 = vperm.xlu0 %175, %v102
    %v177 = vpop.permute.xlu0 %176
    %180 = vset.pattern.permute.xlu0 0
    %181 = vperm.xlu0 %180, %v103
    %v182 = vpop.permute.xlu0 %181
    %185 = vset.pattern.permute.xlu0 0
    %186 = vperm.xlu0 %185, %v104
    %v187 = vpop.permute.xlu0 %186
    %190 = vset.pattern.permute.xlu0 0
    %191 = vperm.xlu0 %190, %v105
    %v192 = vpop.permute.xlu0 %191
    %195 = vset.pattern.permute.xlu0 0
    %196 = vperm.xlu0 %195, %v106
    %v197 = vpop.permute.xlu0 %196
    %200 = vset.pattern.permute.xlu0 0
    %201 = vperm.xlu0 %200, %v107
    %v202 = vpop.permute.xlu0 %201
    %205 = vset.pattern.permute.xlu0 0
    %206 = vperm.xlu0 %205, %v108
    %v207 = vpop.permute.xlu0 %206
    %210 = vset.pattern.permute.xlu0 0
    %211 = vperm.xlu0 %210, %v109
    %v212 = vpop.permute.xlu0 %211
    %215 = vset.pattern.permute.xlu0 0
    %216 = vperm.xlu0 %215, %v110
    %v217 = vpop.permute.xlu0 %216
    %220 = vset.pattern.permute.xlu0 0
    %221 = vperm.xlu0 %220, %v111
    %v222 = vpop.permute.xlu0 %221
    %225 = vset.pattern.permute.xlu0 0
    %226 = vperm.xlu0 %225, %v112
    %v227 = vpop.permute.xlu0 %226
    %230 = vset.pattern.permute.xlu0 0
    %231 = vperm.xlu0 %230, %v113
    %v232 = vpop.permute.xlu0 %231
    %235 = vset.pattern.permute.xlu0 0
    %236 = vperm.xlu0 %235, %v114
    %v237 = vpop.permute.xlu0 %236
    %240 = vset.pattern.permute.xlu0 0
    %241 = vperm.xlu0 %240, %v115
    %v242 = vpop.permute.xlu0 %241
    %245 = vset.pattern.permute.xlu0 0
    %246 = vperm.xlu0 %245, %v116
    %v247 = vpop.permute.xlu0 %246
    %250 = vset.pattern.permute.xlu0 0
    %251 = vperm.xlu0 %250, %v117
    %v252 = vpop.permute.xlu0 %251
    %255 = vset.pattern.permute.xlu0 0
    %256 = vperm.xlu0 %255, %v118
    %v257 = vpop.permute.xlu0 %256
    %260 = vset.pattern.permute.xlu0 0
    %261 = vperm.xlu0 %260, %v119
    %v262 = vpop.permute.xlu0 %261
    %265 = vset.pattern.permute.xlu0 0
    %266 = vperm.xlu0 %265, %v120
    %v267 = vpop.permute.xlu0 %266
    %270 = vset.pattern.permute.xlu0 0
    %271 = vperm.xlu0 %270, %v121
    %v272 = vpop.permute.xlu0 %271
    %275 = vset.pattern.permute.xlu0 0
    %276 = vperm.xlu0 %275, %v122
    %v277 = vpop.permute.xlu0 %276
    %280 = vset.pattern.permute.xlu0 0
    %281 = vperm.xlu0 %280, %v123
    %v282 = vpop.permute.xlu0 %281
    %v316 = vunpack.c.l.b16 %v60
    %v317 = vunpack.c.l.b16 %v61
    %v318 = vunpack.c.l.b16 %v62
    %v319 = vunpack.c.l.b16 %v63
    %v320 = vunpack.c.l.b16 %v64
    %v321 = vunpack.c.l.b16 %v65
    %v322 = vunpack.c.l.b16 %v66
    %v323 = vunpack.c.l.b16 %v67
    %v324 = vunpack.c.l.b16 %v68
    %v325 = vunpack.c.l.b16 %v69
    %v326 = vunpack.c.l.b16 %v70
    %v327 = vunpack.c.l.b16 %v71
    %v328 = vunpack.c.l.b16 %v72
    %v329 = vunpack.c.l.b16 %v73
    %v330 = vunpack.c.l.b16 %v74
    %v331 = vunpack.c.l.b16 %v75
    %v332 = vunpack.c.l.b16 %v76
    %v333 = vunpack.c.l.b16 %v77
    %v334 = vunpack.c.l.b16 %v78
    %v335 = vunpack.c.l.b16 %v79
    %v336 = vunpack.c.l.b16 %v80
    %v337 = vunpack.c.l.b16 %v81
    %v338 = vunpack.c.l.b16 %v82
    %v339 = vunpack.c.l.b16 %v83
    %v340 = vunpack.c.l.b16 %v84
    %v341 = vunpack.c.l.b16 %v85
    %v342 = vunpack.c.l.b16 %v86
    %v343 = vunpack.c.l.b16 %v87
    %v344 = vunpack.c.l.b16 %v88
    %v345 = vunpack.c.l.b16 %v89
    %v346 = vunpack.c.l.b16 %v90
    %v347 = vunpack.c.l.b16 %v91
    %v348 = vpack.c.b16 %v317, %v316
    %v349 = vpack.c.b16 %v319, %v318
    %v350 = vpack.c.b16 %v321, %v320
    %v351 = vpack.c.b16 %v323, %v322
    %v352 = vpack.c.b16 %v325, %v324
    %v353 = vpack.c.b16 %v327, %v326
    %v354 = vpack.c.b16 %v329, %v328
    %v355 = vpack.c.b16 %v331, %v330
    %v356 = vpack.c.b16 %v333, %v332
    %v357 = vpack.c.b16 %v335, %v334
    %v358 = vpack.c.b16 %v337, %v336
    %v359 = vpack.c.b16 %v339, %v338
    %v360 = vpack.c.b16 %v341, %v340
    %v361 = vpack.c.b16 %v343, %v342
    %v362 = vpack.c.b16 %v345, %v344
    %v363 = vpack.c.b16 %v347, %v346
    %vm364 = vcmask 261120
    %v366 = vsel %vm364, %v348, 0
    %v369 = vsel %vm364, %v349, 0
    %v372 = vsel %vm364, %v350, 0
    %v375 = vsel %vm364, %v351, 0
    %v378 = vsel %vm364, %v352, 0
    %v381 = vsel %vm364, %v353, 0
    %v384 = vsel %vm364, %v354, 0
    %v387 = vsel %vm364, %v355, 0
    %v390 = vsel %vm364, %v356, 0
    %v393 = vsel %vm364, %v357, 0
    %v396 = vsel %vm364, %v358, 0
    %v399 = vsel %vm364, %v359, 0
    %v402 = vsel %vm364, %v360, 0
    %v405 = vsel %vm364, %v361, 0
    %v408 = vsel %vm364, %v362, 0
    %v411 = vsel %vm364, %v363, 0
    %v414 = vsel %vm364, %v52, 0
    %v417 = vsel %vm364, %v53, 0
    %v420 = vsel %vm364, %v54, 0
    %v423 = vsel %vm364, %v55, 0
    %v426 = vsel %vm364, %v56, 0
    %v429 = vsel %vm364, %v57, 0
    %v432 = vsel %vm364, %v58, 0
    %v435 = vsel %vm364, %v59, 0
    %437 = vmatprep.subr.bf16.mxu0 0
    %438 = vmatpush1.bf16.xpose.msra.mxu0 %v435
    %439 = vmatprep.subr.bf16.mxu0 0
    %440 = vmatpush1.bf16.xpose.msra.mxu0 %v432
    %441 = vmatprep.subr.bf16.mxu0 0
    %442 = vmatpush1.bf16.xpose.msra.mxu0 %v429
    %443 = vmatprep.subr.bf16.mxu0 0
    %444 = vmatpush1.bf16.xpose.msra.mxu0 %v426
    %445 = vmatprep.subr.bf16.mxu0 0
    %446 = vmatpush1.bf16.xpose.msra.mxu0 %v423
    %447 = vmatprep.subr.bf16.mxu0 0
    %448 = vmatpush1.bf16.xpose.msra.mxu0 %v420
    %449 = vmatprep.subr.bf16.mxu0 0
    %450 = vmatpush1.bf16.xpose.msra.mxu0 %v417
    %451 = vmatprep.subr.bf16.mxu0 0
    %452 = vmatpush1.bf16.xpose.msra.mxu0 %v414
    %453 = vmatprep.subr.bf16.mxu0 0
    %454 = vmatpush2.bf16.xpose.msra.mxu0 0
    %455 = vmatprep.subr.bf16.mxu0 0
    %456 = vmatpush2.bf16.xpose.msra.mxu0 0
    %457 = vmatprep.subr.bf16.mxu0 0
    %458 = vmatpush2.bf16.xpose.msra.mxu0 0
    %459 = vmatprep.subr.bf16.mxu0 0
    %460 = vmatpush2.bf16.xpose.msra.mxu0 0
    %461 = vmatprep.subr.bf16.mxu0 0
    %462 = vmatpush2.bf16.xpose.msra.mxu0 0
    %463 = vmatprep.subr.bf16.mxu0 0
    %464 = vmatpush2.bf16.xpose.msra.mxu0 0
    %465 = vmatprep.subr.bf16.mxu0 0
    %466 = vmatpush2.bf16.xpose.msra.mxu0 0
    %467 = vmatprep.subr.bf16.mxu0 0
    %468 = vmatpush2.bf16.xpose.msra.mxu0 0
    %469 = vmatprep.mubr.bf16.mxu0 0
    %470 = vmatmul.mubr.bf16.gmra.mxu0 %v366
    %v471 = vpop.f32.mrf.mxu0
    %v472 = vadd.f32 %v127, %v471
    %v473 = vpop.f32.mrf.mxu0
    %v474 = vpop.f32.mrf.mxu0
    %v475 = vadd.f32 %v132, %v474
    %v476 = vpop.f32.mrf.mxu0
    %477 = vmatprep.mubr.bf16.mxu0 0
    %478 = vmatmul.mubr.bf16.gmra.mxu0 %v369
    %v479 = vpop.f32.mrf.mxu0
    %v480 = vadd.f32 %v137, %v479
    %v481 = vpop.f32.mrf.mxu0
    %v482 = vpop.f32.mrf.mxu0
    %v483 = vadd.f32 %v142, %v482
    %v484 = vpop.f32.mrf.mxu0
    %485 = vmatprep.mubr.bf16.mxu0 0
    %486 = vmatmul.mubr.bf16.gmra.mxu0 %v372
    %v487 = vpop.f32.mrf.mxu0
    %v488 = vadd.f32 %v147, %v487
    %v489 = vpop.f32.mrf.mxu0
    %v490 = vpop.f32.mrf.mxu0
    %v491 = vadd.f32 %v152, %v490
    %v492 = vpop.f32.mrf.mxu0
    %493 = vmatprep.mubr.bf16.mxu0 0
    %494 = vmatmul.mubr.bf16.gmra.mxu0 %v375
    %v495 = vpop.f32.mrf.mxu0
    %v496 = vadd.f32 %v157, %v495
    %v497 = vpop.f32.mrf.mxu0
    %v498 = vpop.f32.mrf.mxu0
    %v499 = vadd.f32 %v162, %v498
    %v500 = vpop.f32.mrf.mxu0
    %501 = vmatprep.mubr.bf16.mxu0 0
    %502 = vmatmul.mubr.bf16.gmra.mxu0 %v378
    %v503 = vpop.f32.mrf.mxu0
    %v504 = vadd.f32 %v167, %v503
    %v505 = vpop.f32.mrf.mxu0
    %v506 = vpop.f32.mrf.mxu0
    %v507 = vadd.f32 %v172, %v506
    %v508 = vpop.f32.mrf.mxu0
    %509 = vmatprep.mubr.bf16.mxu0 0
    %510 = vmatmul.mubr.bf16.gmra.mxu0 %v381
    %v511 = vpop.f32.mrf.mxu0
    %v512 = vadd.f32 %v177, %v511
    %v513 = vpop.f32.mrf.mxu0
    %v514 = vpop.f32.mrf.mxu0
    %v515 = vadd.f32 %v182, %v514
    %v516 = vpop.f32.mrf.mxu0
    %517 = vmatprep.mubr.bf16.mxu0 0
    %518 = vmatmul.mubr.bf16.gmra.mxu0 %v384
    %v519 = vpop.f32.mrf.mxu0
    %v520 = vadd.f32 %v187, %v519
    %v521 = vpop.f32.mrf.mxu0
    %v522 = vpop.f32.mrf.mxu0
    %v523 = vadd.f32 %v192, %v522
    %v524 = vpop.f32.mrf.mxu0
    %525 = vmatprep.mubr.bf16.mxu0 0
    %526 = vmatmul.mubr.bf16.gmra.mxu0 %v387
    %v527 = vpop.f32.mrf.mxu0
    %v528 = vadd.f32 %v197, %v527
    %v529 = vpop.f32.mrf.mxu0
    %v530 = vpop.f32.mrf.mxu0
    %v531 = vadd.f32 %v202, %v530
    %v532 = vpop.f32.mrf.mxu0
    %533 = vmatprep.mubr.bf16.mxu0 0
    %534 = vmatmul.mubr.bf16.gmra.mxu0 %v390
    %v535 = vpop.f32.mrf.mxu0
    %v536 = vadd.f32 %v207, %v535
    %v537 = vpop.f32.mrf.mxu0
    %v538 = vpop.f32.mrf.mxu0
    %v539 = vadd.f32 %v212, %v538
    %v540 = vpop.f32.mrf.mxu0
    %541 = vmatprep.mubr.bf16.mxu0 0
    %542 = vmatmul.mubr.bf16.gmra.mxu0 %v393
    %v543 = vpop.f32.mrf.mxu0
    %v544 = vadd.f32 %v217, %v543
    %v545 = vpop.f32.mrf.mxu0
    %v546 = vpop.f32.mrf.mxu0
    %v547 = vadd.f32 %v222, %v546
    %v548 = vpop.f32.mrf.mxu0
    %549 = vmatprep.mubr.bf16.mxu0 0
    %550 = vmatmul.mubr.bf16.gmra.mxu0 %v396
    %v551 = vpop.f32.mrf.mxu0
    %v552 = vadd.f32 %v227, %v551
    %v553 = vpop.f32.mrf.mxu0
    %v554 = vpop.f32.mrf.mxu0
    %v555 = vadd.f32 %v232, %v554
    %v556 = vpop.f32.mrf.mxu0
    %557 = vmatprep.mubr.bf16.mxu0 0
    %558 = vmatmul.mubr.bf16.gmra.mxu0 %v399
    %v559 = vpop.f32.mrf.mxu0
    %v560 = vadd.f32 %v237, %v559
    %v561 = vpop.f32.mrf.mxu0
    %v562 = vpop.f32.mrf.mxu0
    %v563 = vadd.f32 %v242, %v562
    %v564 = vpop.f32.mrf.mxu0
    %565 = vmatprep.mubr.bf16.mxu0 0
    %566 = vmatmul.mubr.bf16.gmra.mxu0 %v402
    %v567 = vpop.f32.mrf.mxu0
    %v568 = vadd.f32 %v247, %v567
    %v569 = vpop.f32.mrf.mxu0
    %v570 = vpop.f32.mrf.mxu0
    %v571 = vadd.f32 %v252, %v570
    %v572 = vpop.f32.mrf.mxu0
    %573 = vmatprep.mubr.bf16.mxu0 0
    %574 = vmatmul.mubr.bf16.gmra.mxu0 %v405
    %v575 = vpop.f32.mrf.mxu0
    %v576 = vadd.f32 %v257, %v575
    %v577 = vpop.f32.mrf.mxu0
    %v578 = vpop.f32.mrf.mxu0
    %v579 = vadd.f32 %v262, %v578
    %v580 = vpop.f32.mrf.mxu0
    %581 = vmatprep.mubr.bf16.mxu0 0
    %582 = vmatmul.mubr.bf16.gmra.mxu0 %v408
    %v583 = vpop.f32.mrf.mxu0
    %v584 = vadd.f32 %v267, %v583
    %v585 = vpop.f32.mrf.mxu0
    %v586 = vpop.f32.mrf.mxu0
    %v587 = vadd.f32 %v272, %v586
    %v588 = vpop.f32.mrf.mxu0
    %589 = vmatprep.mubr.bf16.mxu0 0
    %590 = vmatmul.mubr.bf16.gmra.mxu0 %v411
    %v591 = vpop.f32.mrf.mxu0
    %v592 = vadd.f32 %v277, %v591
    %v593 = vpop.f32.mrf.mxu0
    %v594 = vpop.f32.mrf.mxu0
    %v595 = vadd.f32 %v282, %v594
    %v596 = vpop.f32.mrf.mxu0
    %597 = vdwg.mxu0
    %v598 = vmax.f32 %v472, 0.0
    %v599 = vmax.f32 %v475, 0.0
    %v600 = vmax.f32 %v480, 0.0
    %v601 = vmax.f32 %v483, 0.0
    %v602 = vmax.f32 %v488, 0.0
    %v603 = vmax.f32 %v491, 0.0
    %v604 = vmax.f32 %v496, 0.0
    %v605 = vmax.f32 %v499, 0.0
    %v606 = vmax.f32 %v504, 0.0
    %v607 = vmax.f32 %v507, 0.0
    %v608 = vmax.f32 %v512, 0.0
    %v609 = vmax.f32 %v515, 0.0
    %v610 = vmax.f32 %v520, 0.0
    %v611 = vmax.f32 %v523, 0.0
    %v612 = vmax.f32 %v528, 0.0
    %v613 = vmax.f32 %v531, 0.0
    %v614 = vmax.f32 %v536, 0.0
    %v615 = vmax.f32 %v539, 0.0
    %v616 = vmax.f32 %v544, 0.0
    %v617 = vmax.f32 %v547, 0.0
    %v618 = vmax.f32 %v552, 0.0
    %v619 = vmax.f32 %v555, 0.0
    %v620 = vmax.f32 %v560, 0.0
    %v621 = vmax.f32 %v563, 0.0
    %v622 = vmax.f32 %v568, 0.0
    %v623 = vmax.f32 %v571, 0.0
    %v624 = vmax.f32 %v576, 0.0
    %v625 = vmax.f32 %v579, 0.0
    %v626 = vmax.f32 %v584, 0.0
    %v627 = vmax.f32 %v587, 0.0
    %v628 = vmax.f32 %v592, 0.0
    %v629 = vmax.f32 %v595, 0.0
    %v630 = vld [vmem:[%s3] sm:$0xff]
    %v631 = vld [vmem:[%s3 + $0x8] sm:$0xff]
    %v632 = vld [vmem:[%s3 + $0x10] sm:$0xff]
    %v633 = vld [vmem:[%s3 + $0x18] sm:$0xff]
    %v634 = vld [vmem:[%s3 + $0x20] sm:$0xff]
    %v635 = vld [vmem:[%s3 + $0x28] sm:$0xff]
    %v636 = vld [vmem:[%s3 + $0x30] sm:$0xff]
    %v637 = vld [vmem:[%s3 + $0x38] sm:$0xff]
    %v638 = vld [vmem:[%s3 + $0x40] sm:$0xff]
    %v639 = vld [vmem:[%s3 + $0x48] sm:$0xff]
    %v640 = vld [vmem:[%s3 + $0x50] sm:$0xff]
    %v641 = vld [vmem:[%s3 + $0x58] sm:$0xff]
    %v642 = vld [vmem:[%s3 + $0x60] sm:$0xff]
    %v643 = vld [vmem:[%s3 + $0x68] sm:$0xff]
    %v644 = vld [vmem:[%s3 + $0x70] sm:$0xff]
    %v645 = vld [vmem:[%s3 + $0x78] sm:$0xff]
    %v646 = vld [vmem:[%s3 + $0x80] sm:$0xff]
    %v647 = vld [vmem:[%s3 + $0x88] sm:$0xff]
    %v648 = vld [vmem:[%s3 + $0x90] sm:$0xff]
    %v649 = vld [vmem:[%s3 + $0x98] sm:$0xff]
    %v650 = vld [vmem:[%s3 + $0xa0] sm:$0xff]
    %v651 = vld [vmem:[%s3 + $0xa8] sm:$0xff]
    %v652 = vld [vmem:[%s3 + $0xb0] sm:$0xff]
    %v653 = vld [vmem:[%s3 + $0xb8] sm:$0xff]
    %v654 = vld [vmem:[%s3 + $0xc0] sm:$0xff]
    %v655 = vld [vmem:[%s3 + $0xc8] sm:$0xff]
    %v656 = vld [vmem:[%s3 + $0xd0] sm:$0xff]
    %v657 = vld [vmem:[%s3 + $0xd8] sm:$0xff]
    %v658 = vld [vmem:[%s3 + $0xe0] sm:$0xff]
    %v659 = vld [vmem:[%s3 + $0xe8] sm:$0xff]
    %v660 = vld [vmem:[%s3 + $0xf0] sm:$0xff]
    %v661 = vld [vmem:[%s3 + $0xf8] sm:$0xff]
    %v662 = vld [vmem:[%s3 + $0x100] sm:$0xff]
    %v663 = vld [vmem:[%s3 + $0x108] sm:$0xff]
    %v664 = vld [vmem:[%s3 + $0x110] sm:$0xff]
    %v665 = vld [vmem:[%s3 + $0x118] sm:$0xff]
    %v666 = vld [vmem:[%s3 + $0x120] sm:$0xff]
    %v667 = vld [vmem:[%s3 + $0x128] sm:$0xff]
    %v668 = vld [vmem:[%s3 + $0x130] sm:$0xff]
    %v669 = vld [vmem:[%s3 + $0x138] sm:$0xff]
    %v670 = vld [vmem:[%s3 + $0x140] sm:$0xff]
    %v671 = vld [vmem:[%s3 + $0x148] sm:$0xff]
    %v672 = vld [vmem:[%s3 + $0x150] sm:$0xff]
    %v673 = vld [vmem:[%s3 + $0x158] sm:$0xff]
    %v674 = vld [vmem:[%s3 + $0x160] sm:$0xff]
    %v675 = vld [vmem:[%s3 + $0x168] sm:$0xff]
    %v676 = vld [vmem:[%s3 + $0x170] sm:$0xff]
    %v677 = vld [vmem:[%s3 + $0x178] sm:$0xff]
    %v678 = vld [vmem:[%s3 + $0x180] sm:$0xff]
    %v679 = vld [vmem:[%s3 + $0x188] sm:$0xff]
    %v680 = vld [vmem:[%s3 + $0x190] sm:$0xff]
    %v681 = vld [vmem:[%s3 + $0x198] sm:$0xff]
    %v682 = vld [vmem:[%s3 + $0x1a0] sm:$0xff]
    %v683 = vld [vmem:[%s3 + $0x1a8] sm:$0xff]
    %v684 = vld [vmem:[%s3 + $0x1b0] sm:$0xff]
    %v685 = vld [vmem:[%s3 + $0x1b8] sm:$0xff]
    %v686 = vld [vmem:[%s3 + $0x1c0] sm:$0xff]
    %v687 = vld [vmem:[%s3 + $0x1c8] sm:$0xff]
    %v688 = vld [vmem:[%s3 + $0x1d0] sm:$0xff]
    %v689 = vld [vmem:[%s3 + $0x1d8] sm:$0xff]
    %v690 = vld [vmem:[%s3 + $0x1e0] sm:$0xff]
    %v691 = vld [vmem:[%s3 + $0x1e8] sm:$0xff]
    %v692 = vld [vmem:[%s3 + $0x1f0] sm:$0xff]
    %v693 = vld [vmem:[%s3 + $0x1f8] sm:$0xff]
    %v694 = vpack.c.bf16 %v599, %v598
    %v695 = vpack.c.bf16 %v601, %v600
    %v696 = vpack.c.bf16 %v603, %v602
    %v697 = vpack.c.bf16 %v605, %v604
    %v698 = vpack.c.bf16 %v607, %v606
    %v699 = vpack.c.bf16 %v609, %v608
    %v700 = vpack.c.bf16 %v611, %v610
    %v701 = vpack.c.bf16 %v613, %v612
    %v702 = vpack.c.bf16 %v615, %v614
    %v703 = vpack.c.bf16 %v617, %v616
    %v704 = vpack.c.bf16 %v619, %v618
    %v705 = vpack.c.bf16 %v621, %v620
    %v706 = vpack.c.bf16 %v623, %v622
    %v707 = vpack.c.bf16 %v625, %v624
    %v708 = vpack.c.bf16 %v627, %v626
    %v709 = vpack.c.bf16 %v629, %v628
    %v710 = vld [vmem:[%s4] sm:$0xff]
    %v711 = vld [vmem:[%s4 + $0x8] sm:$0xff]
    %v712 = vld [vmem:[%s4 + $0x10] sm:$0xff]
    %v713 = vld [vmem:[%s4 + $0x18] sm:$0xff]
    %v714 = vld [vmem:[%s4 + $0x20] sm:$0xff]
    %v715 = vld [vmem:[%s4 + $0x28] sm:$0xff]
    %v716 = vld [vmem:[%s4 + $0x30] sm:$0xff]
    %v717 = vld [vmem:[%s4 + $0x38] sm:$0xff]
    %v718 = vld [vmem:[%s4 + $0x40] sm:$0xff]
    %v719 = vld [vmem:[%s4 + $0x48] sm:$0xff]
    %v720 = vld [vmem:[%s4 + $0x50] sm:$0xff]
    %v721 = vld [vmem:[%s4 + $0x58] sm:$0xff]
    %v722 = vld [vmem:[%s4 + $0x60] sm:$0xff]
    %v723 = vld [vmem:[%s4 + $0x68] sm:$0xff]
    %v724 = vld [vmem:[%s4 + $0x70] sm:$0xff]
    %v725 = vld [vmem:[%s4 + $0x78] sm:$0xff]
    %v726 = vld [vmem:[%s4 + $0x80] sm:$0xff]
    %v727 = vld [vmem:[%s4 + $0x88] sm:$0xff]
    %v728 = vld [vmem:[%s4 + $0x90] sm:$0xff]
    %v729 = vld [vmem:[%s4 + $0x98] sm:$0xff]
    %v730 = vld [vmem:[%s4 + $0xa0] sm:$0xff]
    %v731 = vld [vmem:[%s4 + $0xa8] sm:$0xff]
    %v732 = vld [vmem:[%s4 + $0xb0] sm:$0xff]
    %v733 = vld [vmem:[%s4 + $0xb8] sm:$0xff]
    %v734 = vld [vmem:[%s4 + $0xc0] sm:$0xff]
    %v735 = vld [vmem:[%s4 + $0xc8] sm:$0xff]
    %v736 = vld [vmem:[%s4 + $0xd0] sm:$0xff]
    %v737 = vld [vmem:[%s4 + $0xd8] sm:$0xff]
    %v738 = vld [vmem:[%s4 + $0xe0] sm:$0xff]
    %v739 = vld [vmem:[%s4 + $0xe8] sm:$0xff]
    %v740 = vld [vmem:[%s4 + $0xf0] sm:$0xff]
    %v741 = vld [vmem:[%s4 + $0xf8] sm:$0xff]
    %v742 = vld [vmem:[%s4 + $0x100] sm:$0xff]
    %v743 = vld [vmem:[%s4 + $0x108] sm:$0xff]
    %v744 = vld [vmem:[%s4 + $0x110] sm:$0xff]
    %v745 = vld [vmem:[%s4 + $0x118] sm:$0xff]
    %v746 = vld [vmem:[%s4 + $0x120] sm:$0xff]
    %v747 = vld [vmem:[%s4 + $0x128] sm:$0xff]
    %v748 = vld [vmem:[%s4 + $0x130] sm:$0xff]
    %v749 = vld [vmem:[%s4 + $0x138] sm:$0xff]
    %v750 = vld [vmem:[%s4 + $0x140] sm:$0xff]
    %v751 = vld [vmem:[%s4 + $0x148] sm:$0xff]
    %v752 = vld [vmem:[%s4 + $0x150] sm:$0xff]
    %v753 = vld [vmem:[%s4 + $0x158] sm:$0xff]
    %v754 = vld [vmem:[%s4 + $0x160] sm:$0xff]
    %v755 = vld [vmem:[%s4 + $0x168] sm:$0xff]
    %v756 = vld [vmem:[%s4 + $0x170] sm:$0xff]
    %v757 = vld [vmem:[%s4 + $0x178] sm:$0xff]
    %v758 = vld [vmem:[%s4 + $0x180] sm:$0xff]
    %v759 = vld [vmem:[%s4 + $0x188] sm:$0xff]
    %v760 = vld [vmem:[%s4 + $0x190] sm:$0xff]
    %v761 = vld [vmem:[%s4 + $0x198] sm:$0xff]
    %v762 = vld [vmem:[%s4 + $0x1a0] sm:$0xff]
    %v763 = vld [vmem:[%s4 + $0x1a8] sm:$0xff]
    %v764 = vld [vmem:[%s4 + $0x1b0] sm:$0xff]
    %v765 = vld [vmem:[%s4 + $0x1b8] sm:$0xff]
    %v766 = vld [vmem:[%s4 + $0x1c0] sm:$0xff]
    %v767 = vld [vmem:[%s4 + $0x1c8] sm:$0xff]
    %v768 = vld [vmem:[%s4 + $0x1d0] sm:$0xff]
    %v769 = vld [vmem:[%s4 + $0x1d8] sm:$0xff]
    %v770 = vld [vmem:[%s4 + $0x1e0] sm:$0xff]
    %v771 = vld [vmem:[%s4 + $0x1e8] sm:$0xff]
    %v772 = vld [vmem:[%s4 + $0x1f0] sm:$0xff]
    %v773 = vld [vmem:[%s4 + $0x1f8] sm:$0xff]
    %775 = vset.pattern.permute.xlu0 0
    %776 = vperm.xlu0 %775, %v710
    %v777 = vpop.permute.xlu0 %776
    %780 = vset.pattern.permute.xlu0 0
    %781 = vperm.xlu0 %780, %v711
    %v782 = vpop.permute.xlu0 %781
    %785 = vset.pattern.permute.xlu0 0
    %786 = vperm.xlu0 %785, %v712
    %v787 = vpop.permute.xlu0 %786
    %790 = vset.pattern.permute.xlu0 0
    %791 = vperm.xlu0 %790, %v713
    %v792 = vpop.permute.xlu0 %791
    %795 = vset.pattern.permute.xlu0 0
    %796 = vperm.xlu0 %795, %v714
    %v797 = vpop.permute.xlu0 %796
    %800 = vset.pattern.permute.xlu0 0
    %801 = vperm.xlu0 %800, %v715
    %v802 = vpop.permute.xlu0 %801
    %805 = vset.pattern.permute.xlu0 0
    %806 = vperm.xlu0 %805, %v716
    %v807 = vpop.permute.xlu0 %806
    %810 = vset.pattern.permute.xlu0 0
    %811 = vperm.xlu0 %810, %v717
    %v812 = vpop.permute.xlu0 %811
    %815 = vset.pattern.permute.xlu0 0
    %816 = vperm.xlu0 %815, %v718
    %v817 = vpop.permute.xlu0 %816
    %820 = vset.pattern.permute.xlu0 0
    %821 = vperm.xlu0 %820, %v719
    %v822 = vpop.permute.xlu0 %821
    %825 = vset.pattern.permute.xlu0 0
    %826 = vperm.xlu0 %825, %v720
    %v827 = vpop.permute.xlu0 %826
    %830 = vset.pattern.permute.xlu0 0
    %831 = vperm.xlu0 %830, %v721
    %v832 = vpop.permute.xlu0 %831
    %835 = vset.pattern.permute.xlu0 0
    %836 = vperm.xlu0 %835, %v722
    %v837 = vpop.permute.xlu0 %836
    %840 = vset.pattern.permute.xlu0 0
    %841 = vperm.xlu0 %840, %v723
    %v842 = vpop.permute.xlu0 %841
    %845 = vset.pattern.permute.xlu0 0
    %846 = vperm.xlu0 %845, %v724
    %v847 = vpop.permute.xlu0 %846
    %850 = vset.pattern.permute.xlu0 0
    %851 = vperm.xlu0 %850, %v725
    %v852 = vpop.permute.xlu0 %851
    %855 = vset.pattern.permute.xlu0 0
    %856 = vperm.xlu0 %855, %v726
    %v857 = vpop.permute.xlu0 %856
    %860 = vset.pattern.permute.xlu0 0
    %861 = vperm.xlu0 %860, %v727
    %v862 = vpop.permute.xlu0 %861
    %865 = vset.pattern.permute.xlu0 0
    %866 = vperm.xlu0 %865, %v728
    %v867 = vpop.permute.xlu0 %866
    %870 = vset.pattern.permute.xlu0 0
    %871 = vperm.xlu0 %870, %v729
    %v872 = vpop.permute.xlu0 %871
    %875 = vset.pattern.permute.xlu0 0
    %876 = vperm.xlu0 %875, %v730
    %v877 = vpop.permute.xlu0 %876
    %880 = vset.pattern.permute.xlu0 0
    %881 = vperm.xlu0 %880, %v731
    %v882 = vpop.permute.xlu0 %881
    %885 = vset.pattern.permute.xlu0 0
    %886 = vperm.xlu0 %885, %v732
    %v887 = vpop.permute.xlu0 %886
    %890 = vset.pattern.permute.xlu0 0
    %891 = vperm.xlu0 %890, %v733
    %v892 = vpop.permute.xlu0 %891
    %895 = vset.pattern.permute.xlu0 0
    %896 = vperm.xlu0 %895, %v734
    %v897 = vpop.permute.xlu0 %896
    %900 = vset.pattern.permute.xlu0 0
    %901 = vperm.xlu0 %900, %v735
    %v902 = vpop.permute.xlu0 %901
    %905 = vset.pattern.permute.xlu0 0
    %906 = vperm.xlu0 %905, %v736
    %v907 = vpop.permute.xlu0 %906
    %910 = vset.pattern.permute.xlu0 0
    %911 = vperm.xlu0 %910, %v737
    %v912 = vpop.permute.xlu0 %911
    %915 = vset.pattern.permute.xlu0 0
    %916 = vperm.xlu0 %915, %v738
    %v917 = vpop.permute.xlu0 %916
    %920 = vset.pattern.permute.xlu0 0
    %921 = vperm.xlu0 %920, %v739
    %v922 = vpop.permute.xlu0 %921
    %925 = vset.pattern.permute.xlu0 0
    %926 = vperm.xlu0 %925, %v740
    %v927 = vpop.permute.xlu0 %926
    %930 = vset.pattern.permute.xlu0 0
    %931 = vperm.xlu0 %930, %v741
    %v932 = vpop.permute.xlu0 %931
    %935 = vset.pattern.permute.xlu0 0
    %936 = vperm.xlu0 %935, %v742
    %v937 = vpop.permute.xlu0 %936
    %940 = vset.pattern.permute.xlu0 0
    %941 = vperm.xlu0 %940, %v743
    %v942 = vpop.permute.xlu0 %941
    %945 = vset.pattern.permute.xlu0 0
    %946 = vperm.xlu0 %945, %v744
    %v947 = vpop.permute.xlu0 %946
    %950 = vset.pattern.permute.xlu0 0
    %951 = vperm.xlu0 %950, %v745
    %v952 = vpop.permute.xlu0 %951
    %955 = vset.pattern.permute.xlu0 0
    %956 = vperm.xlu0 %955, %v746
    %v957 = vpop.permute.xlu0 %956
    %960 = vset.pattern.permute.xlu0 0
    %961 = vperm.xlu0 %960, %v747
    %v962 = vpop.permute.xlu0 %961
    %965 = vset.pattern.permute.xlu0 0
    %966 = vperm.xlu0 %965, %v748
    %v967 = vpop.permute.xlu0 %966
    %970 = vset.pattern.permute.xlu0 0
    %971 = vperm.xlu0 %970, %v749
    %v972 = vpop.permute.xlu0 %971
    %975 = vset.pattern.permute.xlu0 0
    %976 = vperm.xlu0 %975, %v750
    %v977 = vpop.permute.xlu0 %976
    %980 = vset.pattern.permute.xlu0 0
    %981 = vperm.xlu0 %980, %v751
    %v982 = vpop.permute.xlu0 %981
    %985 = vset.pattern.permute.xlu0 0
    %986 = vperm.xlu0 %985, %v752
    %v987 = vpop.permute.xlu0 %986
    %990 = vset.pattern.permute.xlu0 0
    %991 = vperm.xlu0 %990, %v753
    %v992 = vpop.permute.xlu0 %991
    %995 = vset.pattern.permute.xlu0 0
    %996 = vperm.xlu0 %995, %v754
    %v997 = vpop.permute.xlu0 %996
    %1000 = vset.pattern.permute.xlu0 0
    %1001 = vperm.xlu0 %1000, %v755
    %v1002 = vpop.permute.xlu0 %1001
    %1005 = vset.pattern.permute.xlu0 0
    %1006 = vperm.xlu0 %1005, %v756
    %v1007 = vpop.permute.xlu0 %1006
    %1010 = vset.pattern.permute.xlu0 0
    %1011 = vperm.xlu0 %1010, %v757
    %v1012 = vpop.permute.xlu0 %1011
    %1015 = vset.pattern.permute.xlu0 0
    %1016 = vperm.xlu0 %1015, %v758
    %v1017 = vpop.permute.xlu0 %1016
    %1020 = vset.pattern.permute.xlu0 0
    %1021 = vperm.xlu0 %1020, %v759
    %v1022 = vpop.permute.xlu0 %1021
    %1025 = vset.pattern.permute.xlu0 0
    %1026 = vperm.xlu0 %1025, %v760
    %v1027 = vpop.permute.xlu0 %1026
    %1030 = vset.pattern.permute.xlu0 0
    %1031 = vperm.xlu0 %1030, %v761
    %v1032 = vpop.permute.xlu0 %1031
    %1035 = vset.pattern.permute.xlu0 0
    %1036 = vperm.xlu0 %1035, %v762
    %v1037 = vpop.permute.xlu0 %1036
    %1040 = vset.pattern.permute.xlu0 0
    %1041 = vperm.xlu0 %1040, %v763
    %v1042 = vpop.permute.xlu0 %1041
    %1045 = vset.pattern.permute.xlu0 0
    %1046 = vperm.xlu0 %1045, %v764
    %v1047 = vpop.permute.xlu0 %1046
    %1050 = vset.pattern.permute.xlu0 0
    %1051 = vperm.xlu0 %1050, %v765
    %v1052 = vpop.permute.xlu0 %1051
    %1055 = vset.pattern.permute.xlu0 0
    %1056 = vperm.xlu0 %1055, %v766
    %v1057 = vpop.permute.xlu0 %1056
    %1060 = vset.pattern.permute.xlu0 0
    %1061 = vperm.xlu0 %1060, %v767
    %v1062 = vpop.permute.xlu0 %1061
    %1065 = vset.pattern.permute.xlu0 0
    %1066 = vperm.xlu0 %1065, %v768
    %v1067 = vpop.permute.xlu0 %1066
    %1070 = vset.pattern.permute.xlu0 0
    %1071 = vperm.xlu0 %1070, %v769
    %v1072 = vpop.permute.xlu0 %1071
    %1075 = vset.pattern.permute.xlu0 0
    %1076 = vperm.xlu0 %1075, %v770
    %v1077 = vpop.permute.xlu0 %1076
    %1080 = vset.pattern.permute.xlu0 0
    %1081 = vperm.xlu0 %1080, %v771
    %v1082 = vpop.permute.xlu0 %1081
    %1085 = vset.pattern.permute.xlu0 0
    %1086 = vperm.xlu0 %1085, %v772
    %v1087 = vpop.permute.xlu0 %1086
    %1090 = vset.pattern.permute.xlu0 0
    %1091 = vperm.xlu0 %1090, %v773
    %v1092 = vpop.permute.xlu0 %1091
    %v1158 = vunpack.c.l.b16 %v630
    %v1159 = vunpack.c.h.b16 %v630
    %v1160 = vunpack.c.l.b16 %v631
    %v1161 = vunpack.c.h.b16 %v631
    %v1162 = vunpack.c.l.b16 %v632
    %v1163 = vunpack.c.h.b16 %v632
    %v1164 = vunpack.c.l.b16 %v633
    %v1165 = vunpack.c.h.b16 %v633
    %v1166 = vunpack.c.l.b16 %v634
    %v1167 = vunpack.c.h.b16 %v634
    %v1168 = vunpack.c.l.b16 %v635
    %v1169 = vunpack.c.h.b16 %v635
    %v1170 = vunpack.c.l.b16 %v636
    %v1171 = vunpack.c.h.b16 %v636
    %v1172 = vunpack.c.l.b16 %v637
    %v1173 = vunpack.c.h.b16 %v637
    %v1174 = vunpack.c.l.b16 %v638
    %v1175 = vunpack.c.h.b16 %v638
    %v1176 = vunpack.c.l.b16 %v639
    %v1177 = vunpack.c.h.b16 %v639
    %v1178 = vunpack.c.l.b16 %v640
    %v1179 = vunpack.c.h.b16 %v640
    %v1180 = vunpack.c.l.b16 %v641
    %v1181 = vunpack.c.h.b16 %v641
    %v1182 = vunpack.c.l.b16 %v642
    %v1183 = vunpack.c.h.b16 %v642
    %v1184 = vunpack.c.l.b16 %v643
    %v1185 = vunpack.c.h.b16 %v643
    %v1186 = vunpack.c.l.b16 %v644
    %v1187 = vunpack.c.h.b16 %v644
    %v1188 = vunpack.c.l.b16 %v645
    %v1189 = vunpack.c.h.b16 %v645
    %v1190 = vunpack.c.l.b16 %v646
    %v1191 = vunpack.c.h.b16 %v646
    %v1192 = vunpack.c.l.b16 %v647
    %v1193 = vunpack.c.h.b16 %v647
    %v1194 = vunpack.c.l.b16 %v648
    %v1195 = vunpack.c.h.b16 %v648
    %v1196 = vunpack.c.l.b16 %v649
    %v1197 = vunpack.c.h.b16 %v649
    %v1198 = vunpack.c.l.b16 %v650
    %v1199 = vunpack.c.h.b16 %v650
    %v1200 = vunpack.c.l.b16 %v651
    %v1201 = vunpack.c.h.b16 %v651
    %v1202 = vunpack.c.l.b16 %v652
    %v1203 = vunpack.c.h.b16 %v652
    %v1204 = vunpack.c.l.b16 %v653
    %v1205 = vunpack.c.h.b16 %v653
    %v1206 = vunpack.c.l.b16 %v654
    %v1207 = vunpack.c.h.b16 %v654
    %v1208 = vunpack.c.l.b16 %v655
    %v1209 = vunpack.c.h.b16 %v655
    %v1210 = vunpack.c.l.b16 %v656
    %v1211 = vunpack.c.h.b16 %v656
    %v1212 = vunpack.c.l.b16 %v657
    %v1213 = vunpack.c.h.b16 %v657
    %v1214 = vunpack.c.l.b16 %v658
    %v1215 = vunpack.c.h.b16 %v658
    %v1216 = vunpack.c.l.b16 %v659
    %v1217 = vunpack.c.h.b16 %v659
    %v1218 = vunpack.c.l.b16 %v660
    %v1219 = vunpack.c.h.b16 %v660
    %v1220 = vunpack.c.l.b16 %v661
    %v1221 = vunpack.c.h.b16 %v661
    %v1222 = vunpack.c.l.b16 %v662
    %v1223 = vunpack.c.h.b16 %v662
    %v1224 = vunpack.c.l.b16 %v663
    %v1225 = vunpack.c.h.b16 %v663
    %v1226 = vunpack.c.l.b16 %v664
    %v1227 = vunpack.c.h.b16 %v664
    %v1228 = vunpack.c.l.b16 %v665
    %v1229 = vunpack.c.h.b16 %v665
    %v1230 = vunpack.c.l.b16 %v666
    %v1231 = vunpack.c.h.b16 %v666
    %v1232 = vunpack.c.l.b16 %v667
    %v1233 = vunpack.c.h.b16 %v667
    %v1234 = vunpack.c.l.b16 %v668
    %v1235 = vunpack.c.h.b16 %v668
    %v1236 = vunpack.c.l.b16 %v669
    %v1237 = vunpack.c.h.b16 %v669
    %v1238 = vunpack.c.l.b16 %v670
    %v1239 = vunpack.c.h.b16 %v670
    %v1240 = vunpack.c.l.b16 %v671
    %v1241 = vunpack.c.h.b16 %v671
    %v1242 = vunpack.c.l.b16 %v672
    %v1243 = vunpack.c.h.b16 %v672
    %v1244 = vunpack.c.l.b16 %v673
    %v1245 = vunpack.c.h.b16 %v673
    %v1246 = vunpack.c.l.b16 %v674
    %v1247 = vunpack.c.h.b16 %v674
    %v1248 = vunpack.c.l.b16 %v675
    %v1249 = vunpack.c.h.b16 %v675
    %v1250 = vunpack.c.l.b16 %v676
    %v1251 = vunpack.c.h.b16 %v676
    %v1252 = vunpack.c.l.b16 %v677
    %v1253 = vunpack.c.h.b16 %v677
    %v1254 = vunpack.c.l.b16 %v678
    %v1255 = vunpack.c.h.b16 %v678
    %v1256 = vunpack.c.l.b16 %v679
    %v1257 = vunpack.c.h.b16 %v679
    %v1258 = vunpack.c.l.b16 %v680
    %v1259 = vunpack.c.h.b16 %v680
    %v1260 = vunpack.c.l.b16 %v681
    %v1261 = vunpack.c.h.b16 %v681
    %v1262 = vunpack.c.l.b16 %v682
    %v1263 = vunpack.c.h.b16 %v682
    %v1264 = vunpack.c.l.b16 %v683
    %v1265 = vunpack.c.h.b16 %v683
    %v1266 = vunpack.c.l.b16 %v684
    %v1267 = vunpack.c.h.b16 %v684
    %v1268 = vunpack.c.l.b16 %v685
    %v1269 = vunpack.c.h.b16 %v685
    %v1270 = vunpack.c.l.b16 %v686
    %v1271 = vunpack.c.h.b16 %v686
    %v1272 = vunpack.c.l.b16 %v687
    %v1273 = vunpack.c.h.b16 %v687
    %v1274 = vunpack.c.l.b16 %v688
    %v1275 = vunpack.c.h.b16 %v688
    %v1276 = vunpack.c.l.b16 %v689
    %v1277 = vunpack.c.h.b16 %v689
    %v1278 = vunpack.c.l.b16 %v690
    %v1279 = vunpack.c.h.b16 %v690
    %v1280 = vunpack.c.l.b16 %v691
    %v1281 = vunpack.c.h.b16 %v691
    %v1282 = vunpack.c.l.b16 %v692
    %v1283 = vunpack.c.h.b16 %v692
    %v1284 = vunpack.c.l.b16 %v693
    %v1285 = vunpack.c.h.b16 %v693
    %v1286 = vpack.c.b16 %v1160, %v1158
    %v1287 = vpack.c.b16 %v1161, %v1159
    %v1288 = vpack.c.b16 %v1164, %v1162
    %v1289 = vpack.c.b16 %v1165, %v1163
    %v1290 = vpack.c.b16 %v1168, %v1166
    %v1291 = vpack.c.b16 %v1169, %v1167
    %v1292 = vpack.c.b16 %v1172, %v1170
    %v1293 = vpack.c.b16 %v1173, %v1171
    %v1294 = vpack.c.b16 %v1176, %v1174
    %v1295 = vpack.c.b16 %v1177, %v1175
    %v1296 = vpack.c.b16 %v1180, %v1178
    %v1297 = vpack.c.b16 %v1181, %v1179
    %v1298 = vpack.c.b16 %v1184, %v1182
    %v1299 = vpack.c.b16 %v1185, %v1183
    %v1300 = vpack.c.b16 %v1188, %v1186
    %v1301 = vpack.c.b16 %v1189, %v1187
    %v1302 = vpack.c.b16 %v1192, %v1190
    %v1303 = vpack.c.b16 %v1193, %v1191
    %v1304 = vpack.c.b16 %v1196, %v1194
    %v1305 = vpack.c.b16 %v1197, %v1195
    %v1306 = vpack.c.b16 %v1200, %v1198
    %v1307 = vpack.c.b16 %v1201, %v1199
    %v1308 = vpack.c.b16 %v1204, %v1202
    %v1309 = vpack.c.b16 %v1205, %v1203
    %v1310 = vpack.c.b16 %v1208, %v1206
    %v1311 = vpack.c.b16 %v1209, %v1207
    %v1312 = vpack.c.b16 %v1212, %v1210
    %v1313 = vpack.c.b16 %v1213, %v1211
    %v1314 = vpack.c.b16 %v1216, %v1214
    %v1315 = vpack.c.b16 %v1217, %v1215
    %v1316 = vpack.c.b16 %v1220, %v1218
    %v1317 = vpack.c.b16 %v1221, %v1219
    %v1318 = vpack.c.b16 %v1224, %v1222
    %v1319 = vpack.c.b16 %v1225, %v1223
    %v1320 = vpack.c.b16 %v1228, %v1226
    %v1321 = vpack.c.b16 %v1229, %v1227
    %v1322 = vpack.c.b16 %v1232, %v1230
    %v1323 = vpack.c.b16 %v1233, %v1231
    %v1324 = vpack.c.b16 %v1236, %v1234
    %v1325 = vpack.c.b16 %v1237, %v1235
    %v1326 = vpack.c.b16 %v1240, %v1238
    %v1327 = vpack.c.b16 %v1241, %v1239
    %v1328 = vpack.c.b16 %v1244, %v1242
    %v1329 = vpack.c.b16 %v1245, %v1243
    %v1330 = vpack.c.b16 %v1248, %v1246
    %v1331 = vpack.c.b16 %v1249, %v1247
    %v1332 = vpack.c.b16 %v1252, %v1250
    %v1333 = vpack.c.b16 %v1253, %v1251
    %v1334 = vpack.c.b16 %v1256, %v1254
    %v1335 = vpack.c.b16 %v1257, %v1255
    %v1336 = vpack.c.b16 %v1260, %v1258
    %v1337 = vpack.c.b16 %v1261, %v1259
    %v1338 = vpack.c.b16 %v1264, %v1262
    %v1339 = vpack.c.b16 %v1265, %v1263
    %v1340 = vpack.c.b16 %v1268, %v1266
    %v1341 = vpack.c.b16 %v1269, %v1267
    %v1342 = vpack.c.b16 %v1272, %v1270
    %v1343 = vpack.c.b16 %v1273, %v1271
    %v1344 = vpack.c.b16 %v1276, %v1274
    %v1345 = vpack.c.b16 %v1277, %v1275
    %v1346 = vpack.c.b16 %v1280, %v1278
    %v1347 = vpack.c.b16 %v1281, %v1279
    %v1348 = vpack.c.b16 %v1284, %v1282
    %v1349 = vpack.c.b16 %v1285, %v1283
    %1414 = vmatprep.subr.bf16.mxu0 0
    %1415 = vmatpush1.bf16.msra.mxu0 %v701
    %1416 = vmatprep.subr.bf16.mxu0 0
    %1417 = vmatpush1.bf16.msra.mxu0 %v700
    %1418 = vmatprep.subr.bf16.mxu0 0
    %1419 = vmatpush1.bf16.msra.mxu0 %v699
    %1420 = vmatprep.subr.bf16.mxu0 0
    %1421 = vmatpush1.bf16.msra.mxu0 %v698
    %1422 = vmatprep.subr.bf16.mxu0 0
    %1423 = vmatpush1.bf16.msra.mxu0 %v697
    %1424 = vmatprep.subr.bf16.mxu0 0
    %1425 = vmatpush1.bf16.msra.mxu0 %v696
    %1426 = vmatprep.subr.bf16.mxu0 0
    %1427 = vmatpush1.bf16.msra.mxu0 %v695
    %1428 = vmatprep.subr.bf16.mxu0 0
    %1429 = vmatpush1.bf16.msra.mxu0 %v694
    %1430 = vmatprep.subr.bf16.mxu0 0
    %1431 = vmatpush2.bf16.msra.mxu0 %v709
    %1432 = vmatprep.subr.bf16.mxu0 0
    %1433 = vmatpush2.bf16.msra.mxu0 %v708
    %1434 = vmatprep.subr.bf16.mxu0 0
    %1435 = vmatpush2.bf16.msra.mxu0 %v707
    %1436 = vmatprep.subr.bf16.mxu0 0
    %1437 = vmatpush2.bf16.msra.mxu0 %v706
    %1438 = vmatprep.subr.bf16.mxu0 0
    %1439 = vmatpush2.bf16.msra.mxu0 %v705
    %1440 = vmatprep.subr.bf16.mxu0 0
    %1441 = vmatpush2.bf16.msra.mxu0 %v704
    %1442 = vmatprep.subr.bf16.mxu0 0
    %1443 = vmatpush2.bf16.msra.mxu0 %v703
    %1444 = vmatprep.subr.bf16.mxu0 0
    %1445 = vmatpush2.bf16.msra.mxu0 %v702
    %1446 = vmatprep.mubr.bf16.mxu0 %v1287
    %1447 = vmatmul.mubr.bf16.gmra.mxu0 %v1286
    %v1448 = vpop.f32.mrf.mxu0
    %v1449 = vadd.f32 %v777, %v1448
    %v1450 = vpop.f32.mrf.mxu0
    %v1451 = vpop.f32.mrf.mxu0
    %v1452 = vadd.f32 %v782, %v1451
    %v1453 = vpop.f32.mrf.mxu0
    %1454 = vmatprep.mubr.bf16.mxu0 %v1289
    %1455 = vmatmul.mubr.bf16.gmra.mxu0 %v1288
    %v1456 = vpop.f32.mrf.mxu0
    %v1457 = vadd.f32 %v787, %v1456
    %v1458 = vpop.f32.mrf.mxu0
    %v1459 = vpop.f32.mrf.mxu0
    %v1460 = vadd.f32 %v792, %v1459
    %v1461 = vpop.f32.mrf.mxu0
    %1462 = vmatprep.mubr.bf16.mxu0 %v1291
    %1463 = vmatmul.mubr.bf16.gmra.mxu0 %v1290
    %v1464 = vpop.f32.mrf.mxu0
    %v1465 = vadd.f32 %v797, %v1464
    %v1466 = vpop.f32.mrf.mxu0
    %v1467 = vpop.f32.mrf.mxu0
    %v1468 = vadd.f32 %v802, %v1467
    %v1469 = vpop.f32.mrf.mxu0
    %1470 = vmatprep.mubr.bf16.mxu0 %v1293
    %1471 = vmatmul.mubr.bf16.gmra.mxu0 %v1292
    %v1472 = vpop.f32.mrf.mxu0
    %v1473 = vadd.f32 %v807, %v1472
    %v1474 = vpop.f32.mrf.mxu0
    %v1475 = vpop.f32.mrf.mxu0
    %v1476 = vadd.f32 %v812, %v1475
    %v1477 = vpop.f32.mrf.mxu0
    %1478 = vmatprep.mubr.bf16.mxu0 %v1295
    %1479 = vmatmul.mubr.bf16.gmra.mxu0 %v1294
    %v1480 = vpop.f32.mrf.mxu0
    %v1481 = vadd.f32 %v817, %v1480
    %v1482 = vpop.f32.mrf.mxu0
    %v1483 = vpop.f32.mrf.mxu0
    %v1484 = vadd.f32 %v822, %v1483
    %v1485 = vpop.f32.mrf.mxu0
    %1486 = vmatprep.mubr.bf16.mxu0 %v1297
    %1487 = vmatmul.mubr.bf16.gmra.mxu0 %v1296
    %v1488 = vpop.f32.mrf.mxu0
    %v1489 = vadd.f32 %v827, %v1488
    %v1490 = vpop.f32.mrf.mxu0
    %v1491 = vpop.f32.mrf.mxu0
    %v1492 = vadd.f32 %v832, %v1491
    %v1493 = vpop.f32.mrf.mxu0
    %1494 = vmatprep.mubr.bf16.mxu0 %v1299
    %1495 = vmatmul.mubr.bf16.gmra.mxu0 %v1298
    %v1496 = vpop.f32.mrf.mxu0
    %v1497 = vadd.f32 %v837, %v1496
    %v1498 = vpop.f32.mrf.mxu0
    %v1499 = vpop.f32.mrf.mxu0
    %v1500 = vadd.f32 %v842, %v1499
    %v1501 = vpop.f32.mrf.mxu0
    %1502 = vmatprep.mubr.bf16.mxu0 %v1301
    %1503 = vmatmul.mubr.bf16.gmra.mxu0 %v1300
    %v1504 = vpop.f32.mrf.mxu0
    %v1505 = vadd.f32 %v847, %v1504
    %v1506 = vpop.f32.mrf.mxu0
    %v1507 = vpop.f32.mrf.mxu0
    %v1508 = vadd.f32 %v852, %v1507
    %v1509 = vpop.f32.mrf.mxu0
    %1510 = vmatprep.mubr.bf16.mxu0 %v1303
    %1511 = vmatmul.mubr.bf16.gmra.mxu0 %v1302
    %v1512 = vpop.f32.mrf.mxu0
    %v1513 = vadd.f32 %v857, %v1512
    %v1514 = vpop.f32.mrf.mxu0
    %v1515 = vpop.f32.mrf.mxu0
    %v1516 = vadd.f32 %v862, %v1515
    %v1517 = vpop.f32.mrf.mxu0
    %1518 = vmatprep.mubr.bf16.mxu0 %v1305
    %1519 = vmatmul.mubr.bf16.gmra.mxu0 %v1304
    %v1520 = vpop.f32.mrf.mxu0
    %v1521 = vadd.f32 %v867, %v1520
    %v1522 = vpop.f32.mrf.mxu0
    %v1523 = vpop.f32.mrf.mxu0
    %v1524 = vadd.f32 %v872, %v1523
    %v1525 = vpop.f32.mrf.mxu0
    %1526 = vmatprep.mubr.bf16.mxu0 %v1307
    %1527 = vmatmul.mubr.bf16.gmra.mxu0 %v1306
    %v1528 = vpop.f32.mrf.mxu0
    %v1529 = vadd.f32 %v877, %v1528
    %v1530 = vpop.f32.mrf.mxu0
    %v1531 = vpop.f32.mrf.mxu0
    %v1532 = vadd.f32 %v882, %v1531
    %v1533 = vpop.f32.mrf.mxu0
    %1534 = vmatprep.mubr.bf16.mxu0 %v1309
    %1535 = vmatmul.mubr.bf16.gmra.mxu0 %v1308
    %v1536 = vpop.f32.mrf.mxu0
    %v1537 = vadd.f32 %v887, %v1536
    %v1538 = vpop.f32.mrf.mxu0
    %v1539 = vpop.f32.mrf.mxu0
    %v1540 = vadd.f32 %v892, %v1539
    %v1541 = vpop.f32.mrf.mxu0
    %1542 = vmatprep.mubr.bf16.mxu0 %v1311
    %1543 = vmatmul.mubr.bf16.gmra.mxu0 %v1310
    %v1544 = vpop.f32.mrf.mxu0
    %v1545 = vadd.f32 %v897, %v1544
    %v1546 = vpop.f32.mrf.mxu0
    %v1547 = vpop.f32.mrf.mxu0
    %v1548 = vadd.f32 %v902, %v1547
    %v1549 = vpop.f32.mrf.mxu0
    %1550 = vmatprep.mubr.bf16.mxu0 %v1313
    %1551 = vmatmul.mubr.bf16.gmra.mxu0 %v1312
    %v1552 = vpop.f32.mrf.mxu0
    %v1553 = vadd.f32 %v907, %v1552
    %v1554 = vpop.f32.mrf.mxu0
    %v1555 = vpop.f32.mrf.mxu0
    %v1556 = vadd.f32 %v912, %v1555
    %v1557 = vpop.f32.mrf.mxu0
    %1558 = vmatprep.mubr.bf16.mxu0 %v1315
    %1559 = vmatmul.mubr.bf16.gmra.mxu0 %v1314
    %v1560 = vpop.f32.mrf.mxu0
    %v1561 = vadd.f32 %v917, %v1560
    %v1562 = vpop.f32.mrf.mxu0
    %v1563 = vpop.f32.mrf.mxu0
    %v1564 = vadd.f32 %v922, %v1563
    %v1565 = vpop.f32.mrf.mxu0
    %1566 = vmatprep.mubr.bf16.mxu0 %v1317
    %1567 = vmatmul.mubr.bf16.gmra.mxu0 %v1316
    %v1568 = vpop.f32.mrf.mxu0
    %v1569 = vadd.f32 %v927, %v1568
    %v1570 = vpop.f32.mrf.mxu0
    %v1571 = vpop.f32.mrf.mxu0
    %v1572 = vadd.f32 %v932, %v1571
    %v1573 = vpop.f32.mrf.mxu0
    %1574 = vmatprep.mubr.bf16.mxu0 %v1319
    %1575 = vmatmul.mubr.bf16.gmra.mxu0 %v1318
    %v1576 = vpop.f32.mrf.mxu0
    %v1577 = vadd.f32 %v937, %v1576
    %v1578 = vpop.f32.mrf.mxu0
    %v1579 = vpop.f32.mrf.mxu0
    %v1580 = vadd.f32 %v942, %v1579
    %v1581 = vpop.f32.mrf.mxu0
    %1582 = vmatprep.mubr.bf16.mxu0 %v1321
    %1583 = vmatmul.mubr.bf16.gmra.mxu0 %v1320
    %v1584 = vpop.f32.mrf.mxu0
    %v1585 = vadd.f32 %v947, %v1584
    %v1586 = vpop.f32.mrf.mxu0
    %v1587 = vpop.f32.mrf.mxu0
    %v1588 = vadd.f32 %v952, %v1587
    %v1589 = vpop.f32.mrf.mxu0
    %1590 = vmatprep.mubr.bf16.mxu0 %v1323
    %1591 = vmatmul.mubr.bf16.gmra.mxu0 %v1322
    %v1592 = vpop.f32.mrf.mxu0
    %v1593 = vadd.f32 %v957, %v1592
    %v1594 = vpop.f32.mrf.mxu0
    %v1595 = vpop.f32.mrf.mxu0
    %v1596 = vadd.f32 %v962, %v1595
    %v1597 = vpop.f32.mrf.mxu0
    %1598 = vmatprep.mubr.bf16.mxu0 %v1325
    %1599 = vmatmul.mubr.bf16.gmra.mxu0 %v1324
    %v1600 = vpop.f32.mrf.mxu0
    %v1601 = vadd.f32 %v967, %v1600
    %v1602 = vpop.f32.mrf.mxu0
    %v1603 = vpop.f32.mrf.mxu0
    %v1604 = vadd.f32 %v972, %v1603
    %v1605 = vpop.f32.mrf.mxu0
    %1606 = vmatprep.mubr.bf16.mxu0 %v1327
    %1607 = vmatmul.mubr.bf16.gmra.mxu0 %v1326
    %v1608 = vpop.f32.mrf.mxu0
    %v1609 = vadd.f32 %v977, %v1608
    %v1610 = vpop.f32.mrf.mxu0
    %v1611 = vpop.f32.mrf.mxu0
    %v1612 = vadd.f32 %v982, %v1611
    %v1613 = vpop.f32.mrf.mxu0
    %1614 = vmatprep.mubr.bf16.mxu0 %v1329
    %1615 = vmatmul.mubr.bf16.gmra.mxu0 %v1328
    %v1616 = vpop.f32.mrf.mxu0
    %v1617 = vadd.f32 %v987, %v1616
    %v1618 = vpop.f32.mrf.mxu0
    %v1619 = vpop.f32.mrf.mxu0
    %v1620 = vadd.f32 %v992, %v1619
    %v1621 = vpop.f32.mrf.mxu0
    %1622 = vmatprep.mubr.bf16.mxu0 %v1331
    %1623 = vmatmul.mubr.bf16.gmra.mxu0 %v1330
    %v1624 = vpop.f32.mrf.mxu0
    %v1625 = vadd.f32 %v997, %v1624
    %v1626 = vpop.f32.mrf.mxu0
    %v1627 = vpop.f32.mrf.mxu0
    %v1628 = vadd.f32 %v1002, %v1627
    %v1629 = vpop.f32.mrf.mxu0
    %1630 = vmatprep.mubr.bf16.mxu0 %v1333
    %1631 = vmatmul.mubr.bf16.gmra.mxu0 %v1332
    %v1632 = vpop.f32.mrf.mxu0
    %v1633 = vadd.f32 %v1007, %v1632
    %v1634 = vpop.f32.mrf.mxu0
    %v1635 = vpop.f32.mrf.mxu0
    %v1636 = vadd.f32 %v1012, %v1635
    %v1637 = vpop.f32.mrf.mxu0
    %1638 = vmatprep.mubr.bf16.mxu0 %v1335
    %1639 = vmatmul.mubr.bf16.gmra.mxu0 %v1334
    %v1640 = vpop.f32.mrf.mxu0
    %v1641 = vadd.f32 %v1017, %v1640
    %v1642 = vpop.f32.mrf.mxu0
    %v1643 = vpop.f32.mrf.mxu0
    %v1644 = vadd.f32 %v1022, %v1643
    %v1645 = vpop.f32.mrf.mxu0
    %1646 = vmatprep.mubr.bf16.mxu0 %v1337
    %1647 = vmatmul.mubr.bf16.gmra.mxu0 %v1336
    %v1648 = vpop.f32.mrf.mxu0
    %v1649 = vadd.f32 %v1027, %v1648
    %v1650 = vpop.f32.mrf.mxu0
    %v1651 = vpop.f32.mrf.mxu0
    %v1652 = vadd.f32 %v1032, %v1651
    %v1653 = vpop.f32.mrf.mxu0
    %1654 = vmatprep.mubr.bf16.mxu0 %v1339
    %1655 = vmatmul.mubr.bf16.gmra.mxu0 %v1338
    %v1656 = vpop.f32.mrf.mxu0
    %v1657 = vadd.f32 %v1037, %v1656
    %v1658 = vpop.f32.mrf.mxu0
    %v1659 = vpop.f32.mrf.mxu0
    %v1660 = vadd.f32 %v1042, %v1659
    %v1661 = vpop.f32.mrf.mxu0
    %1662 = vmatprep.mubr.bf16.mxu0 %v1341
    %1663 = vmatmul.mubr.bf16.gmra.mxu0 %v1340
    %v1664 = vpop.f32.mrf.mxu0
    %v1665 = vadd.f32 %v1047, %v1664
    %v1666 = vpop.f32.mrf.mxu0
    %v1667 = vpop.f32.mrf.mxu0
    %v1668 = vadd.f32 %v1052, %v1667
    %v1669 = vpop.f32.mrf.mxu0
    %1670 = vmatprep.mubr.bf16.mxu0 %v1343
    %1671 = vmatmul.mubr.bf16.gmra.mxu0 %v1342
    %v1672 = vpop.f32.mrf.mxu0
    %v1673 = vadd.f32 %v1057, %v1672
    %v1674 = vpop.f32.mrf.mxu0
    %v1675 = vpop.f32.mrf.mxu0
    %v1676 = vadd.f32 %v1062, %v1675
    %v1677 = vpop.f32.mrf.mxu0
    %1678 = vmatprep.mubr.bf16.mxu0 %v1345
    %1679 = vmatmul.mubr.bf16.gmra.mxu0 %v1344
    %v1680 = vpop.f32.mrf.mxu0
    %v1681 = vadd.f32 %v1067, %v1680
    %v1682 = vpop.f32.mrf.mxu0
    %v1683 = vpop.f32.mrf.mxu0
    %v1684 = vadd.f32 %v1072, %v1683
    %v1685 = vpop.f32.mrf.mxu0
    %1686 = vmatprep.mubr.bf16.mxu0 %v1347
    %1687 = vmatmul.mubr.bf16.gmra.mxu0 %v1346
    %v1688 = vpop.f32.mrf.mxu0
    %v1689 = vadd.f32 %v1077, %v1688
    %v1690 = vpop.f32.mrf.mxu0
    %v1691 = vpop.f32.mrf.mxu0
    %v1692 = vadd.f32 %v1082, %v1691
    %v1693 = vpop.f32.mrf.mxu0
    %1694 = vmatprep.mubr.bf16.mxu0 %v1349
    %1695 = vmatmul.mubr.bf16.gmra.mxu0 %v1348
    %v1696 = vpop.f32.mrf.mxu0
    %v1697 = vadd.f32 %v1087, %v1696
    %v1698 = vpop.f32.mrf.mxu0
    %v1699 = vpop.f32.mrf.mxu0
    %v1700 = vadd.f32 %v1092, %v1699
    %v1701 = vpop.f32.mrf.mxu0
    %1702 = vdwg.mxu0
    %v1703 = vmax.f32 %v1449, 0.0
    %v1704 = vmax.f32 %v1452, 0.0
    %v1705 = vmax.f32 %v1457, 0.0
    %v1706 = vmax.f32 %v1460, 0.0
    %v1707 = vmax.f32 %v1465, 0.0
    %v1708 = vmax.f32 %v1468, 0.0
    %v1709 = vmax.f32 %v1473, 0.0
    %v1710 = vmax.f32 %v1476, 0.0
    %v1711 = vmax.f32 %v1481, 0.0
    %v1712 = vmax.f32 %v1484, 0.0
    %v1713 = vmax.f32 %v1489, 0.0
    %v1714 = vmax.f32 %v1492, 0.0
    %v1715 = vmax.f32 %v1497, 0.0
    %v1716 = vmax.f32 %v1500, 0.0
    %v1717 = vmax.f32 %v1505, 0.0
    %v1718 = vmax.f32 %v1508, 0.0
    %v1719 = vmax.f32 %v1513, 0.0
    %v1720 = vmax.f32 %v1516, 0.0
    %v1721 = vmax.f32 %v1521, 0.0
    %v1722 = vmax.f32 %v1524, 0.0
    %v1723 = vmax.f32 %v1529, 0.0
    %v1724 = vmax.f32 %v1532, 0.0
    %v1725 = vmax.f32 %v1537, 0.0
    %v1726 = vmax.f32 %v1540, 0.0
    %v1727 = vmax.f32 %v1545, 0.0
    %v1728 = vmax.f32 %v1548, 0.0
    %v1729 = vmax.f32 %v1553, 0.0
    %v1730 = vmax.f32 %v1556, 0.0
    %v1731 = vmax.f32 %v1561, 0.0
    %v1732 = vmax.f32 %v1564, 0.0
    %v1733 = vmax.f32 %v1569, 0.0
    %v1734 = vmax.f32 %v1572, 0.0
    %v1735 = vmax.f32 %v1577, 0.0
    %v1736 = vmax.f32 %v1580, 0.0
    %v1737 = vmax.f32 %v1585, 0.0
    %v1738 = vmax.f32 %v1588, 0.0
    %v1739 = vmax.f32 %v1593, 0.0
    %v1740 = vmax.f32 %v1596, 0.0
    %v1741 = vmax.f32 %v1601, 0.0
    %v1742 = vmax.f32 %v1604, 0.0
    %v1743 = vmax.f32 %v1609, 0.0
    %v1744 = vmax.f32 %v1612, 0.0
    %v1745 = vmax.f32 %v1617, 0.0
    %v1746 = vmax.f32 %v1620, 0.0
    %v1747 = vmax.f32 %v1625, 0.0
    %v1748 = vmax.f32 %v1628, 0.0
    %v1749 = vmax.f32 %v1633, 0.0
    %v1750 = vmax.f32 %v1636, 0.0
    %v1751 = vmax.f32 %v1641, 0.0
    %v1752 = vmax.f32 %v1644, 0.0
    %v1753 = vmax.f32 %v1649, 0.0
    %v1754 = vmax.f32 %v1652, 0.0
    %v1755 = vmax.f32 %v1657, 0.0
    %v1756 = vmax.f32 %v1660, 0.0
    %v1757 = vmax.f32 %v1665, 0.0
    %v1758 = vmax.f32 %v1668, 0.0
    %v1759 = vmax.f32 %v1673, 0.0
    %v1760 = vmax.f32 %v1676, 0.0
    %v1761 = vmax.f32 %v1681, 0.0
    %v1762 = vmax.f32 %v1684, 0.0
    %v1763 = vmax.f32 %v1689, 0.0
    %v1764 = vmax.f32 %v1692, 0.0
    %v1765 = vmax.f32 %v1697, 0.0
    %v1766 = vmax.f32 %v1700, 0.0
    %v1767 = vld [vmem:[%s5] sm:$0xff]
    %v1768 = vld [vmem:[%s5 + $0x8] sm:$0xff]
    %v1769 = vld [vmem:[%s5 + $0x10] sm:$0xff]
    %v1770 = vld [vmem:[%s5 + $0x18] sm:$0xff]
    %v1771 = vld [vmem:[%s5 + $0x20] sm:$0xff]
    %v1772 = vld [vmem:[%s5 + $0x28] sm:$0xff]
    %v1773 = vld [vmem:[%s5 + $0x30] sm:$0xff]
    %v1774 = vld [vmem:[%s5 + $0x38] sm:$0xff]
    %v1775 = vld [vmem:[%s5 + $0x40] sm:$0xff]
    %v1776 = vld [vmem:[%s5 + $0x48] sm:$0xff]
    %v1777 = vld [vmem:[%s5 + $0x50] sm:$0xff]
    %v1778 = vld [vmem:[%s5 + $0x58] sm:$0xff]
    %v1779 = vld [vmem:[%s5 + $0x60] sm:$0xff]
    %v1780 = vld [vmem:[%s5 + $0x68] sm:$0xff]
    %v1781 = vld [vmem:[%s5 + $0x70] sm:$0xff]
    %v1782 = vld [vmem:[%s5 + $0x78] sm:$0xff]
    %v1783 = vld [vmem:[%s5 + $0x80] sm:$0xff]
    %v1784 = vld [vmem:[%s5 + $0x88] sm:$0xff]
    %v1785 = vld [vmem:[%s5 + $0x90] sm:$0xff]
    %v1786 = vld [vmem:[%s5 + $0x98] sm:$0xff]
    %v1787 = vld [vmem:[%s5 + $0xa0] sm:$0xff]
    %v1788 = vld [vmem:[%s5 + $0xa8] sm:$0xff]
    %v1789 = vld [vmem:[%s5 + $0xb0] sm:$0xff]
    %v1790 = vld [vmem:[%s5 + $0xb8] sm:$0xff]
    %v1791 = vld [vmem:[%s5 + $0xc0] sm:$0xff]
    %v1792 = vld [vmem:[%s5 + $0xc8] sm:$0xff]
    %v1793 = vld [vmem:[%s5 + $0xd0] sm:$0xff]
    %v1794 = vld [vmem:[%s5 + $0xd8] sm:$0xff]
    %v1795 = vld [vmem:[%s5 + $0xe0] sm:$0xff]
    %v1796 = vld [vmem:[%s5 + $0xe8] sm:$0xff]
    %v1797 = vld [vmem:[%s5 + $0xf0] sm:$0xff]
    %v1798 = vld [vmem:[%s5 + $0xf8] sm:$0xff]
    %v1799 = vld [vmem:[%s5 + $0x100] sm:$0xff]
    %v1800 = vld [vmem:[%s5 + $0x108] sm:$0xff]
    %v1801 = vld [vmem:[%s5 + $0x110] sm:$0xff]
    %v1802 = vld [vmem:[%s5 + $0x118] sm:$0xff]
    %v1803 = vld [vmem:[%s5 + $0x120] sm:$0xff]
    %v1804 = vld [vmem:[%s5 + $0x128] sm:$0xff]
    %v1805 = vld [vmem:[%s5 + $0x130] sm:$0xff]
    %v1806 = vld [vmem:[%s5 + $0x138] sm:$0xff]
    %v1807 = vld [vmem:[%s5 + $0x140] sm:$0xff]
    %v1808 = vld [vmem:[%s5 + $0x148] sm:$0xff]
    %v1809 = vld [vmem:[%s5 + $0x150] sm:$0xff]
    %v1810 = vld [vmem:[%s5 + $0x158] sm:$0xff]
    %v1811 = vld [vmem:[%s5 + $0x160] sm:$0xff]
    %v1812 = vld [vmem:[%s5 + $0x168] sm:$0xff]
    %v1813 = vld [vmem:[%s5 + $0x170] sm:$0xff]
    %v1814 = vld [vmem:[%s5 + $0x178] sm:$0xff]
    %v1815 = vld [vmem:[%s5 + $0x180] sm:$0xff]
    %v1816 = vld [vmem:[%s5 + $0x188] sm:$0xff]
    %v1817 = vld [vmem:[%s5 + $0x190] sm:$0xff]
    %v1818 = vld [vmem:[%s5 + $0x198] sm:$0xff]
    %v1819 = vld [vmem:[%s5 + $0x1a0] sm:$0xff]
    %v1820 = vld [vmem:[%s5 + $0x1a8] sm:$0xff]
    %v1821 = vld [vmem:[%s5 + $0x1b0] sm:$0xff]
    %v1822 = vld [vmem:[%s5 + $0x1b8] sm:$0xff]
    %v1823 = vld [vmem:[%s5 + $0x1c0] sm:$0xff]
    %v1824 = vld [vmem:[%s5 + $0x1c8] sm:$0xff]
    %v1825 = vld [vmem:[%s5 + $0x1d0] sm:$0xff]
    %v1826 = vld [vmem:[%s5 + $0x1d8] sm:$0xff]
    %v1827 = vld [vmem:[%s5 + $0x1e0] sm:$0xff]
    %v1828 = vld [vmem:[%s5 + $0x1e8] sm:$0xff]
    %v1829 = vld [vmem:[%s5 + $0x1f0] sm:$0xff]
    %v1830 = vld [vmem:[%s5 + $0x1f8] sm:$0xff]
    %v1831 = vpack.c.bf16 %v1704, %v1703
    %v1832 = vpack.c.bf16 %v1706, %v1705
    %v1833 = vpack.c.bf16 %v1708, %v1707
    %v1834 = vpack.c.bf16 %v1710, %v1709
    %v1835 = vpack.c.bf16 %v1712, %v1711
    %v1836 = vpack.c.bf16 %v1714, %v1713
    %v1837 = vpack.c.bf16 %v1716, %v1715
    %v1838 = vpack.c.bf16 %v1718, %v1717
    %v1839 = vpack.c.bf16 %v1720, %v1719
    %v1840 = vpack.c.bf16 %v1722, %v1721
    %v1841 = vpack.c.bf16 %v1724, %v1723
    %v1842 = vpack.c.bf16 %v1726, %v1725
    %v1843 = vpack.c.bf16 %v1728, %v1727
    %v1844 = vpack.c.bf16 %v1730, %v1729
    %v1845 = vpack.c.bf16 %v1732, %v1731
    %v1846 = vpack.c.bf16 %v1734, %v1733
    %v1847 = vpack.c.bf16 %v1736, %v1735
    %v1848 = vpack.c.bf16 %v1738, %v1737
    %v1849 = vpack.c.bf16 %v1740, %v1739
    %v1850 = vpack.c.bf16 %v1742, %v1741
    %v1851 = vpack.c.bf16 %v1744, %v1743
    %v1852 = vpack.c.bf16 %v1746, %v1745
    %v1853 = vpack.c.bf16 %v1748, %v1747
    %v1854 = vpack.c.bf16 %v1750, %v1749
    %v1855 = vpack.c.bf16 %v1752, %v1751
    %v1856 = vpack.c.bf16 %v1754, %v1753
    %v1857 = vpack.c.bf16 %v1756, %v1755
    %v1858 = vpack.c.bf16 %v1758, %v1757
    %v1859 = vpack.c.bf16 %v1760, %v1759
    %v1860 = vpack.c.bf16 %v1762, %v1761
    %v1861 = vpack.c.bf16 %v1764, %v1763
    %v1862 = vpack.c.bf16 %v1766, %v1765
    %v1863 = vld [vmem:[%s6] sm:$0xff]
    %v1864 = vld [vmem:[%s6 + $0x8] sm:$0xff]
    %v1865 = vld [vmem:[%s6 + $0x10] sm:$0xff]
    %v1866 = vld [vmem:[%s6 + $0x18] sm:$0xff]
    %v1867 = vld [vmem:[%s6 + $0x20] sm:$0xff]
    %v1868 = vld [vmem:[%s6 + $0x28] sm:$0xff]
    %v1869 = vld [vmem:[%s6 + $0x30] sm:$0xff]
    %v1870 = vld [vmem:[%s6 + $0x38] sm:$0xff]
    %v1871 = vld [vmem:[%s6 + $0x40] sm:$0xff]
    %v1872 = vld [vmem:[%s6 + $0x48] sm:$0xff]
    %v1873 = vld [vmem:[%s6 + $0x50] sm:$0xff]
    %v1874 = vld [vmem:[%s6 + $0x58] sm:$0xff]
    %v1875 = vld [vmem:[%s6 + $0x60] sm:$0xff]
    %v1876 = vld [vmem:[%s6 + $0x68] sm:$0xff]
    %v1877 = vld [vmem:[%s6 + $0x70] sm:$0xff]
    %v1878 = vld [vmem:[%s6 + $0x78] sm:$0xff]
    %v1879 = vld [vmem:[%s6 + $0x80] sm:$0xff]
    %v1880 = vld [vmem:[%s6 + $0x88] sm:$0xff]
    %v1881 = vld [vmem:[%s6 + $0x90] sm:$0xff]
    %v1882 = vld [vmem:[%s6 + $0x98] sm:$0xff]
    %v1883 = vld [vmem:[%s6 + $0xa0] sm:$0xff]
    %v1884 = vld [vmem:[%s6 + $0xa8] sm:$0xff]
    %v1885 = vld [vmem:[%s6 + $0xb0] sm:$0xff]
    %v1886 = vld [vmem:[%s6 + $0xb8] sm:$0xff]
    %v1887 = vld [vmem:[%s6 + $0xc0] sm:$0xff]
    %v1888 = vld [vmem:[%s6 + $0xc8] sm:$0xff]
    %v1889 = vld [vmem:[%s6 + $0xd0] sm:$0xff]
    %v1890 = vld [vmem:[%s6 + $0xd8] sm:$0xff]
    %v1891 = vld [vmem:[%s6 + $0xe0] sm:$0xff]
    %v1892 = vld [vmem:[%s6 + $0xe8] sm:$0xff]
    %v1893 = vld [vmem:[%s6 + $0xf0] sm:$0xff]
    %v1894 = vld [vmem:[%s6 + $0xf8] sm:$0xff]
    %1896 = vset.pattern.permute.xlu0 0
    %1897 = vperm.xlu0 %1896, %v1863
    %v1898 = vpop.permute.xlu0 %1897
    %1901 = vset.pattern.permute.xlu0 0
    %1902 = vperm.xlu0 %1901, %v1864
    %v1903 = vpop.permute.xlu0 %1902
    %1906 = vset.pattern.permute.xlu0 0
    %1907 = vperm.xlu0 %1906, %v1865
    %v1908 = vpop.permute.xlu0 %1907
    %1911 = vset.pattern.permute.xlu0 0
    %1912 = vperm.xlu0 %1911, %v1866
    %v1913 = vpop.permute.xlu0 %1912
    %1916 = vset.pattern.permute.xlu0 0
    %1917 = vperm.xlu0 %1916, %v1867
    %v1918 = vpop.permute.xlu0 %1917
    %1921 = vset.pattern.permute.xlu0 0
    %1922 = vperm.xlu0 %1921, %v1868
    %v1923 = vpop.permute.xlu0 %1922
    %1926 = vset.pattern.permute.xlu0 0
    %1927 = vperm.xlu0 %1926, %v1869
    %v1928 = vpop.permute.xlu0 %1927
    %1931 = vset.pattern.permute.xlu0 0
    %1932 = vperm.xlu0 %1931, %v1870
    %v1933 = vpop.permute.xlu0 %1932
    %1936 = vset.pattern.permute.xlu0 0
    %1937 = vperm.xlu0 %1936, %v1871
    %v1938 = vpop.permute.xlu0 %1937
    %1941 = vset.pattern.permute.xlu0 0
    %1942 = vperm.xlu0 %1941, %v1872
    %v1943 = vpop.permute.xlu0 %1942
    %1946 = vset.pattern.permute.xlu0 0
    %1947 = vperm.xlu0 %1946, %v1873
    %v1948 = vpop.permute.xlu0 %1947
    %1951 = vset.pattern.permute.xlu0 0
    %1952 = vperm.xlu0 %1951, %v1874
    %v1953 = vpop.permute.xlu0 %1952
    %1956 = vset.pattern.permute.xlu0 0
    %1957 = vperm.xlu0 %1956, %v1875
    %v1958 = vpop.permute.xlu0 %1957
    %1961 = vset.pattern.permute.xlu0 0
    %1962 = vperm.xlu0 %1961, %v1876
    %v1963 = vpop.permute.xlu0 %1962
    %1966 = vset.pattern.permute.xlu0 0
    %1967 = vperm.xlu0 %1966, %v1877
    %v1968 = vpop.permute.xlu0 %1967
    %1971 = vset.pattern.permute.xlu0 0
    %1972 = vperm.xlu0 %1971, %v1878
    %v1973 = vpop.permute.xlu0 %1972
    %1976 = vset.pattern.permute.xlu0 0
    %1977 = vperm.xlu0 %1976, %v1879
    %v1978 = vpop.permute.xlu0 %1977
    %1981 = vset.pattern.permute.xlu0 0
    %1982 = vperm.xlu0 %1981, %v1880
    %v1983 = vpop.permute.xlu0 %1982
    %1986 = vset.pattern.permute.xlu0 0
    %1987 = vperm.xlu0 %1986, %v1881
    %v1988 = vpop.permute.xlu0 %1987
    %1991 = vset.pattern.permute.xlu0 0
    %1992 = vperm.xlu0 %1991, %v1882
    %v1993 = vpop.permute.xlu0 %1992
    %1996 = vset.pattern.permute.xlu0 0
    %1997 = vperm.xlu0 %1996, %v1883
    %v1998 = vpop.permute.xlu0 %1997
    %2001 = vset.pattern.permute.xlu0 0
    %2002 = vperm.xlu0 %2001, %v1884
    %v2003 = vpop.permute.xlu0 %2002
    %2006 = vset.pattern.permute.xlu0 0
    %2007 = vperm.xlu0 %2006, %v1885
    %v2008 = vpop.permute.xlu0 %2007
    %2011 = vset.pattern.permute.xlu0 0
    %2012 = vperm.xlu0 %2011, %v1886
    %v2013 = vpop.permute.xlu0 %2012
    %2016 = vset.pattern.permute.xlu0 0
    %2017 = vperm.xlu0 %2016, %v1887
    %v2018 = vpop.permute.xlu0 %2017
    %2021 = vset.pattern.permute.xlu0 0
    %2022 = vperm.xlu0 %2021, %v1888
    %v2023 = vpop.permute.xlu0 %2022
    %2026 = vset.pattern.permute.xlu0 0
    %2027 = vperm.xlu0 %2026, %v1889
    %v2028 = vpop.permute.xlu0 %2027
    %2031 = vset.pattern.permute.xlu0 0
    %2032 = vperm.xlu0 %2031, %v1890
    %v2033 = vpop.permute.xlu0 %2032
    %2036 = vset.pattern.permute.xlu0 0
    %2037 = vperm.xlu0 %2036, %v1891
    %v2038 = vpop.permute.xlu0 %2037
    %2041 = vset.pattern.permute.xlu0 0
    %2042 = vperm.xlu0 %2041, %v1892
    %v2043 = vpop.permute.xlu0 %2042
    %2046 = vset.pattern.permute.xlu0 0
    %2047 = vperm.xlu0 %2046, %v1893
    %v2048 = vpop.permute.xlu0 %2047
    %2051 = vset.pattern.permute.xlu0 0
    %2052 = vperm.xlu0 %2051, %v1894
    %v2053 = vpop.permute.xlu0 %2052
    %v2119 = vunpack.c.l.b16 %v1767
    %v2120 = vunpack.c.h.b16 %v1767
    %v2121 = vunpack.c.l.b16 %v1768
    %v2122 = vunpack.c.h.b16 %v1768
    %v2123 = vunpack.c.l.b16 %v1769
    %v2124 = vunpack.c.h.b16 %v1769
    %v2125 = vunpack.c.l.b16 %v1770
    %v2126 = vunpack.c.h.b16 %v1770
    %v2127 = vunpack.c.l.b16 %v1771
    %v2128 = vunpack.c.h.b16 %v1771
    %v2129 = vunpack.c.l.b16 %v1772
    %v2130 = vunpack.c.h.b16 %v1772
    %v2131 = vunpack.c.l.b16 %v1773
    %v2132 = vunpack.c.h.b16 %v1773
    %v2133 = vunpack.c.l.b16 %v1774
    %v2134 = vunpack.c.h.b16 %v1774
    %v2135 = vunpack.c.l.b16 %v1775
    %v2136 = vunpack.c.h.b16 %v1775
    %v2137 = vunpack.c.l.b16 %v1776
    %v2138 = vunpack.c.h.b16 %v1776
    %v2139 = vunpack.c.l.b16 %v1777
    %v2140 = vunpack.c.h.b16 %v1777
    %v2141 = vunpack.c.l.b16 %v1778
    %v2142 = vunpack.c.h.b16 %v1778
    %v2143 = vunpack.c.l.b16 %v1779
    %v2144 = vunpack.c.h.b16 %v1779
    %v2145 = vunpack.c.l.b16 %v1780
    %v2146 = vunpack.c.h.b16 %v1780
    %v2147 = vunpack.c.l.b16 %v1781
    %v2148 = vunpack.c.h.b16 %v1781
    %v2149 = vunpack.c.l.b16 %v1782
    %v2150 = vunpack.c.h.b16 %v1782
    %v2151 = vunpack.c.l.b16 %v1783
    %v2152 = vunpack.c.h.b16 %v1783
    %v2153 = vunpack.c.l.b16 %v1784
    %v2154 = vunpack.c.h.b16 %v1784
    %v2155 = vunpack.c.l.b16 %v1785
    %v2156 = vunpack.c.h.b16 %v1785
    %v2157 = vunpack.c.l.b16 %v1786
    %v2158 = vunpack.c.h.b16 %v1786
    %v2159 = vunpack.c.l.b16 %v1787
    %v2160 = vunpack.c.h.b16 %v1787
    %v2161 = vunpack.c.l.b16 %v1788
    %v2162 = vunpack.c.h.b16 %v1788
    %v2163 = vunpack.c.l.b16 %v1789
    %v2164 = vunpack.c.h.b16 %v1789
    %v2165 = vunpack.c.l.b16 %v1790
    %v2166 = vunpack.c.h.b16 %v1790
    %v2167 = vunpack.c.l.b16 %v1791
    %v2168 = vunpack.c.h.b16 %v1791
    %v2169 = vunpack.c.l.b16 %v1792
    %v2170 = vunpack.c.h.b16 %v1792
    %v2171 = vunpack.c.l.b16 %v1793
    %v2172 = vunpack.c.h.b16 %v1793
    %v2173 = vunpack.c.l.b16 %v1794
    %v2174 = vunpack.c.h.b16 %v1794
    %v2175 = vunpack.c.l.b16 %v1795
    %v2176 = vunpack.c.h.b16 %v1795
    %v2177 = vunpack.c.l.b16 %v1796
    %v2178 = vunpack.c.h.b16 %v1796
    %v2179 = vunpack.c.l.b16 %v1797
    %v2180 = vunpack.c.h.b16 %v1797
    %v2181 = vunpack.c.l.b16 %v1798
    %v2182 = vunpack.c.h.b16 %v1798
    %v2183 = vunpack.c.l.b16 %v1799
    %v2184 = vunpack.c.h.b16 %v1799
    %v2185 = vunpack.c.l.b16 %v1800
    %v2186 = vunpack.c.h.b16 %v1800
    %v2187 = vunpack.c.l.b16 %v1801
    %v2188 = vunpack.c.h.b16 %v1801
    %v2189 = vunpack.c.l.b16 %v1802
    %v2190 = vunpack.c.h.b16 %v1802
    %v2191 = vunpack.c.l.b16 %v1803
    %v2192 = vunpack.c.h.b16 %v1803
    %v2193 = vunpack.c.l.b16 %v1804
    %v2194 = vunpack.c.h.b16 %v1804
    %v2195 = vunpack.c.l.b16 %v1805
    %v2196 = vunpack.c.h.b16 %v1805
    %v2197 = vunpack.c.l.b16 %v1806
    %v2198 = vunpack.c.h.b16 %v1806
    %v2199 = vunpack.c.l.b16 %v1807
    %v2200 = vunpack.c.h.b16 %v1807
    %v2201 = vunpack.c.l.b16 %v1808
    %v2202 = vunpack.c.h.b16 %v1808
    %v2203 = vunpack.c.l.b16 %v1809
    %v2204 = vunpack.c.h.b16 %v1809
    %v2205 = vunpack.c.l.b16 %v1810
    %v2206 = vunpack.c.h.b16 %v1810
    %v2207 = vunpack.c.l.b16 %v1811
    %v2208 = vunpack.c.h.b16 %v1811
    %v2209 = vunpack.c.l.b16 %v1812
    %v2210 = vunpack.c.h.b16 %v1812
    %v2211 = vunpack.c.l.b16 %v1813
    %v2212 = vunpack.c.h.b16 %v1813
    %v2213 = vunpack.c.l.b16 %v1814
    %v2214 = vunpack.c.h.b16 %v1814
    %v2215 = vunpack.c.l.b16 %v1815
    %v2216 = vunpack.c.h.b16 %v1815
    %v2217 = vunpack.c.l.b16 %v1816
    %v2218 = vunpack.c.h.b16 %v1816
    %v2219 = vunpack.c.l.b16 %v1817
    %v2220 = vunpack.c.h.b16 %v1817
    %v2221 = vunpack.c.l.b16 %v1818
    %v2222 = vunpack.c.h.b16 %v1818
    %v2223 = vunpack.c.l.b16 %v1819
    %v2224 = vunpack.c.h.b16 %v1819
    %v2225 = vunpack.c.l.b16 %v1820
    %v2226 = vunpack.c.h.b16 %v1820
    %v2227 = vunpack.c.l.b16 %v1821
    %v2228 = vunpack.c.h.b16 %v1821
    %v2229 = vunpack.c.l.b16 %v1822
    %v2230 = vunpack.c.h.b16 %v1822
    %v2231 = vunpack.c.l.b16 %v1823
    %v2232 = vunpack.c.h.b16 %v1823
    %v2233 = vunpack.c.l.b16 %v1824
    %v2234 = vunpack.c.h.b16 %v1824
    %v2235 = vunpack.c.l.b16 %v1825
    %v2236 = vunpack.c.h.b16 %v1825
    %v2237 = vunpack.c.l.b16 %v1826
    %v2238 = vunpack.c.h.b16 %v1826
    %v2239 = vunpack.c.l.b16 %v1827
    %v2240 = vunpack.c.h.b16 %v1827
    %v2241 = vunpack.c.l.b16 %v1828
    %v2242 = vunpack.c.h.b16 %v1828
    %v2243 = vunpack.c.l.b16 %v1829
    %v2244 = vunpack.c.h.b16 %v1829
    %v2245 = vunpack.c.l.b16 %v1830
    %v2246 = vunpack.c.h.b16 %v1830
    %v2247 = vpack.c.b16 %v2123, %v2119
    %v2248 = vpack.c.b16 %v2124, %v2120
    %v2249 = vpack.c.b16 %v2125, %v2121
    %v2250 = vpack.c.b16 %v2126, %v2122
    %v2251 = vpack.c.b16 %v2131, %v2127
    %v2252 = vpack.c.b16 %v2132, %v2128
    %v2253 = vpack.c.b16 %v2133, %v2129
    %v2254 = vpack.c.b16 %v2134, %v2130
    %v2255 = vpack.c.b16 %v2139, %v2135
    %v2256 = vpack.c.b16 %v2140, %v2136
    %v2257 = vpack.c.b16 %v2141, %v2137
    %v2258 = vpack.c.b16 %v2142, %v2138
    %v2259 = vpack.c.b16 %v2147, %v2143
    %v2260 = vpack.c.b16 %v2148, %v2144
    %v2261 = vpack.c.b16 %v2149, %v2145
    %v2262 = vpack.c.b16 %v2150, %v2146
    %v2263 = vpack.c.b16 %v2155, %v2151
    %v2264 = vpack.c.b16 %v2156, %v2152
    %v2265 = vpack.c.b16 %v2157, %v2153
    %v2266 = vpack.c.b16 %v2158, %v2154
    %v2267 = vpack.c.b16 %v2163, %v2159
    %v2268 = vpack.c.b16 %v2164, %v2160
    %v2269 = vpack.c.b16 %v2165, %v2161
    %v2270 = vpack.c.b16 %v2166, %v2162
    %v2271 = vpack.c.b16 %v2171, %v2167
    %v2272 = vpack.c.b16 %v2172, %v2168
    %v2273 = vpack.c.b16 %v2173, %v2169
    %v2274 = vpack.c.b16 %v2174, %v2170
    %v2275 = vpack.c.b16 %v2179, %v2175
    %v2276 = vpack.c.b16 %v2180, %v2176
    %v2277 = vpack.c.b16 %v2181, %v2177
    %v2278 = vpack.c.b16 %v2182, %v2178
    %v2279 = vpack.c.b16 %v2187, %v2183
    %v2280 = vpack.c.b16 %v2188, %v2184
    %v2281 = vpack.c.b16 %v2189, %v2185
    %v2282 = vpack.c.b16 %v2190, %v2186
    %v2283 = vpack.c.b16 %v2195, %v2191
    %v2284 = vpack.c.b16 %v2196, %v2192
    %v2285 = vpack.c.b16 %v2197, %v2193
    %v2286 = vpack.c.b16 %v2198, %v2194
    %v2287 = vpack.c.b16 %v2203, %v2199
    %v2288 = vpack.c.b16 %v2204, %v2200
    %v2289 = vpack.c.b16 %v2205, %v2201
    %v2290 = vpack.c.b16 %v2206, %v2202
    %v2291 = vpack.c.b16 %v2211, %v2207
    %v2292 = vpack.c.b16 %v2212, %v2208
    %v2293 = vpack.c.b16 %v2213, %v2209
    %v2294 = vpack.c.b16 %v2214, %v2210
    %v2295 = vpack.c.b16 %v2219, %v2215
    %v2296 = vpack.c.b16 %v2220, %v2216
    %v2297 = vpack.c.b16 %v2221, %v2217
    %v2298 = vpack.c.b16 %v2222, %v2218
    %v2299 = vpack.c.b16 %v2227, %v2223
    %v2300 = vpack.c.b16 %v2228, %v2224
    %v2301 = vpack.c.b16 %v2229, %v2225
    %v2302 = vpack.c.b16 %v2230, %v2226
    %v2303 = vpack.c.b16 %v2235, %v2231
    %v2304 = vpack.c.b16 %v2236, %v2232
    %v2305 = vpack.c.b16 %v2237, %v2233
    %v2306 = vpack.c.b16 %v2238, %v2234
    %v2307 = vpack.c.b16 %v2243, %v2239
    %v2308 = vpack.c.b16 %v2244, %v2240
    %v2309 = vpack.c.b16 %v2245, %v2241
    %v2310 = vpack.c.b16 %v2246, %v2242
    %2375 = vmatprep.subr.bf16.mxu0 0
    %2376 = vmatpush1.bf16.msra.mxu0 %v1838
    %2377 = vmatprep.subr.bf16.mxu0 0
    %2378 = vmatpush1.bf16.msra.mxu0 %v1837
    %2379 = vmatprep.subr.bf16.mxu0 0
    %2380 = vmatpush1.bf16.msra.mxu0 %v1836
    %2381 = vmatprep.subr.bf16.mxu0 0
    %2382 = vmatpush1.bf16.msra.mxu0 %v1835
    %2383 = vmatprep.subr.bf16.mxu0 0
    %2384 = vmatpush1.bf16.msra.mxu0 %v1834
    %2385 = vmatprep.subr.bf16.mxu0 0
    %2386 = vmatpush1.bf16.msra.mxu0 %v1833
    %2387 = vmatprep.subr.bf16.mxu0 0
    %2388 = vmatpush1.bf16.msra.mxu0 %v1832
    %2389 = vmatprep.subr.bf16.mxu0 0
    %2390 = vmatpush1.bf16.msra.mxu0 %v1831
    %2391 = vmatprep.subr.bf16.mxu0 0
    %2392 = vmatpush2.bf16.msra.mxu0 %v1846
    %2393 = vmatprep.subr.bf16.mxu0 0
    %2394 = vmatpush2.bf16.msra.mxu0 %v1845
    %2395 = vmatprep.subr.bf16.mxu0 0
    %2396 = vmatpush2.bf16.msra.mxu0 %v1844
    %2397 = vmatprep.subr.bf16.mxu0 0
    %2398 = vmatpush2.bf16.msra.mxu0 %v1843
    %2399 = vmatprep.subr.bf16.mxu0 0
    %2400 = vmatpush2.bf16.msra.mxu0 %v1842
    %2401 = vmatprep.subr.bf16.mxu0 0
    %2402 = vmatpush2.bf16.msra.mxu0 %v1841
    %2403 = vmatprep.subr.bf16.mxu0 0
    %2404 = vmatpush2.bf16.msra.mxu0 %v1840
    %2405 = vmatprep.subr.bf16.mxu0 0
    %2406 = vmatpush2.bf16.msra.mxu0 %v1839
    %2407 = vmatprep.mubr.bf16.mxu0 %v2248
    %2408 = vmatmul.mubr.bf16.gmra.mxu0 %v2247
    %v2409 = vpop.f32.mrf.mxu0
    %v2410 = vadd.f32 %v1898, %v2409
    %v2411 = vpop.f32.mrf.mxu0
    %v2412 = vpop.f32.mrf.mxu0
    %v2413 = vadd.f32 %v1903, %v2412
    %v2414 = vpop.f32.mrf.mxu0
    %2415 = vmatprep.mubr.bf16.mxu0 %v2252
    %2416 = vmatmul.mubr.bf16.gmra.mxu0 %v2251
    %v2417 = vpop.f32.mrf.mxu0
    %v2418 = vadd.f32 %v1908, %v2417
    %v2419 = vpop.f32.mrf.mxu0
    %v2420 = vpop.f32.mrf.mxu0
    %v2421 = vadd.f32 %v1913, %v2420
    %v2422 = vpop.f32.mrf.mxu0
    %2423 = vmatprep.mubr.bf16.mxu0 %v2256
    %2424 = vmatmul.mubr.bf16.gmra.mxu0 %v2255
    %v2425 = vpop.f32.mrf.mxu0
    %v2426 = vadd.f32 %v1918, %v2425
    %v2427 = vpop.f32.mrf.mxu0
    %v2428 = vpop.f32.mrf.mxu0
    %v2429 = vadd.f32 %v1923, %v2428
    %v2430 = vpop.f32.mrf.mxu0
    %2431 = vmatprep.mubr.bf16.mxu0 %v2260
    %2432 = vmatmul.mubr.bf16.gmra.mxu0 %v2259
    %v2433 = vpop.f32.mrf.mxu0
    %v2434 = vadd.f32 %v1928, %v2433
    %v2435 = vpop.f32.mrf.mxu0
    %v2436 = vpop.f32.mrf.mxu0
    %v2437 = vadd.f32 %v1933, %v2436
    %v2438 = vpop.f32.mrf.mxu0
    %2439 = vmatprep.mubr.bf16.mxu0 %v2264
    %2440 = vmatmul.mubr.bf16.gmra.mxu0 %v2263
    %v2441 = vpop.f32.mrf.mxu0
    %v2442 = vadd.f32 %v1938, %v2441
    %v2443 = vpop.f32.mrf.mxu0
    %v2444 = vpop.f32.mrf.mxu0
    %v2445 = vadd.f32 %v1943, %v2444
    %v2446 = vpop.f32.mrf.mxu0
    %2447 = vmatprep.mubr.bf16.mxu0 %v2268
    %2448 = vmatmul.mubr.bf16.gmra.mxu0 %v2267
    %v2449 = vpop.f32.mrf.mxu0
    %v2450 = vadd.f32 %v1948, %v2449
    %v2451 = vpop.f32.mrf.mxu0
    %v2452 = vpop.f32.mrf.mxu0
    %v2453 = vadd.f32 %v1953, %v2452
    %v2454 = vpop.f32.mrf.mxu0
    %2455 = vmatprep.mubr.bf16.mxu0 %v2272
    %2456 = vmatmul.mubr.bf16.gmra.mxu0 %v2271
    %v2457 = vpop.f32.mrf.mxu0
    %v2458 = vadd.f32 %v1958, %v2457
    %v2459 = vpop.f32.mrf.mxu0
    %v2460 = vpop.f32.mrf.mxu0
    %v2461 = vadd.f32 %v1963, %v2460
    %v2462 = vpop.f32.mrf.mxu0
    %2463 = vmatprep.mubr.bf16.mxu0 %v2276
    %2464 = vmatmul.mubr.bf16.gmra.mxu0 %v2275
    %v2465 = vpop.f32.mrf.mxu0
    %v2466 = vadd.f32 %v1968, %v2465
    %v2467 = vpop.f32.mrf.mxu0
    %v2468 = vpop.f32.mrf.mxu0
    %v2469 = vadd.f32 %v1973, %v2468
    %v2470 = vpop.f32.mrf.mxu0
    %2471 = vmatprep.mubr.bf16.mxu0 %v2280
    %2472 = vmatmul.mubr.bf16.gmra.mxu0 %v2279
    %v2473 = vpop.f32.mrf.mxu0
    %v2474 = vadd.f32 %v1978, %v2473
    %v2475 = vpop.f32.mrf.mxu0
    %v2476 = vpop.f32.mrf.mxu0
    %v2477 = vadd.f32 %v1983, %v2476
    %v2478 = vpop.f32.mrf.mxu0
    %2479 = vmatprep.mubr.bf16.mxu0 %v2284
    %2480 = vmatmul.mubr.bf16.gmra.mxu0 %v2283
    %v2481 = vpop.f32.mrf.mxu0
    %v2482 = vadd.f32 %v1988, %v2481
    %v2483 = vpop.f32.mrf.mxu0
    %v2484 = vpop.f32.mrf.mxu0
    %v2485 = vadd.f32 %v1993, %v2484
    %v2486 = vpop.f32.mrf.mxu0
    %2487 = vmatprep.mubr.bf16.mxu0 %v2288
    %2488 = vmatmul.mubr.bf16.gmra.mxu0 %v2287
    %v2489 = vpop.f32.mrf.mxu0
    %v2490 = vadd.f32 %v1998, %v2489
    %v2491 = vpop.f32.mrf.mxu0
    %v2492 = vpop.f32.mrf.mxu0
    %v2493 = vadd.f32 %v2003, %v2492
    %v2494 = vpop.f32.mrf.mxu0
    %2495 = vmatprep.mubr.bf16.mxu0 %v2292
    %2496 = vmatmul.mubr.bf16.gmra.mxu0 %v2291
    %v2497 = vpop.f32.mrf.mxu0
    %v2498 = vadd.f32 %v2008, %v2497
    %v2499 = vpop.f32.mrf.mxu0
    %v2500 = vpop.f32.mrf.mxu0
    %v2501 = vadd.f32 %v2013, %v2500
    %v2502 = vpop.f32.mrf.mxu0
    %2503 = vmatprep.mubr.bf16.mxu0 %v2296
    %2504 = vmatmul.mubr.bf16.gmra.mxu0 %v2295
    %v2505 = vpop.f32.mrf.mxu0
    %v2506 = vadd.f32 %v2018, %v2505
    %v2507 = vpop.f32.mrf.mxu0
    %v2508 = vpop.f32.mrf.mxu0
    %v2509 = vadd.f32 %v2023, %v2508
    %v2510 = vpop.f32.mrf.mxu0
    %2511 = vmatprep.mubr.bf16.mxu0 %v2300
    %2512 = vmatmul.mubr.bf16.gmra.mxu0 %v2299
    %v2513 = vpop.f32.mrf.mxu0
    %v2514 = vadd.f32 %v2028, %v2513
    %v2515 = vpop.f32.mrf.mxu0
    %v2516 = vpop.f32.mrf.mxu0
    %v2517 = vadd.f32 %v2033, %v2516
    %v2518 = vpop.f32.mrf.mxu0
    %2519 = vmatprep.mubr.bf16.mxu0 %v2304
    %2520 = vmatmul.mubr.bf16.gmra.mxu0 %v2303
    %v2521 = vpop.f32.mrf.mxu0
    %v2522 = vadd.f32 %v2038, %v2521
    %v2523 = vpop.f32.mrf.mxu0
    %v2524 = vpop.f32.mrf.mxu0
    %v2525 = vadd.f32 %v2043, %v2524
    %v2526 = vpop.f32.mrf.mxu0
    %2527 = vmatprep.mubr.bf16.mxu0 %v2308
    %2528 = vmatmul.mubr.bf16.gmra.mxu0 %v2307
    %v2529 = vpop.f32.mrf.mxu0
    %v2530 = vadd.f32 %v2048, %v2529
    %v2531 = vpop.f32.mrf.mxu0
    %v2532 = vpop.f32.mrf.mxu0
    %v2533 = vadd.f32 %v2053, %v2532
    %v2534 = vpop.f32.mrf.mxu0
    %2535 = vdwg.mxu0
    %2536 = vmatprep.subr.bf16.mxu0 0
    %2537 = vmatpush1.bf16.msra.mxu0 %v1854
    %2538 = vmatprep.subr.bf16.mxu0 0
    %2539 = vmatpush1.bf16.msra.mxu0 %v1853
    %2540 = vmatprep.subr.bf16.mxu0 0
    %2541 = vmatpush1.bf16.msra.mxu0 %v1852
    %2542 = vmatprep.subr.bf16.mxu0 0
    %2543 = vmatpush1.bf16.msra.mxu0 %v1851
    %2544 = vmatprep.subr.bf16.mxu0 0
    %2545 = vmatpush1.bf16.msra.mxu0 %v1850
    %2546 = vmatprep.subr.bf16.mxu0 0
    %2547 = vmatpush1.bf16.msra.mxu0 %v1849
    %2548 = vmatprep.subr.bf16.mxu0 0
    %2549 = vmatpush1.bf16.msra.mxu0 %v1848
    %2550 = vmatprep.subr.bf16.mxu0 0
    %2551 = vmatpush1.bf16.msra.mxu0 %v1847
    %2552 = vmatprep.subr.bf16.mxu0 0
    %2553 = vmatpush2.bf16.msra.mxu0 %v1862
    %2554 = vmatprep.subr.bf16.mxu0 0
    %2555 = vmatpush2.bf16.msra.mxu0 %v1861
    %2556 = vmatprep.subr.bf16.mxu0 0
    %2557 = vmatpush2.bf16.msra.mxu0 %v1860
    %2558 = vmatprep.subr.bf16.mxu0 0
    %2559 = vmatpush2.bf16.msra.mxu0 %v1859
    %2560 = vmatprep.subr.bf16.mxu0 0
    %2561 = vmatpush2.bf16.msra.mxu0 %v1858
    %2562 = vmatprep.subr.bf16.mxu0 0
    %2563 = vmatpush2.bf16.msra.mxu0 %v1857
    %2564 = vmatprep.subr.bf16.mxu0 0
    %2565 = vmatpush2.bf16.msra.mxu0 %v1856
    %2566 = vmatprep.subr.bf16.mxu0 0
    %2567 = vmatpush2.bf16.msra.mxu0 %v1855
    %2568 = vmatprep.mubr.bf16.mxu0 %v2250
    %2569 = vmatmul.mubr.bf16.gmra.mxu0 %v2249
    %v2570 = vpop.f32.mrf.mxu0
    %v2571 = vadd.f32 %v2410, %v2570
    %v2572 = vpop.f32.mrf.mxu0
    %v2573 = vpop.f32.mrf.mxu0
    %v2574 = vadd.f32 %v2413, %v2573
    %v2575 = vpop.f32.mrf.mxu0
    %2576 = vmatprep.mubr.bf16.mxu0 %v2254
    %2577 = vmatmul.mubr.bf16.gmra.mxu0 %v2253
    %v2578 = vpop.f32.mrf.mxu0
    %v2579 = vadd.f32 %v2418, %v2578
    %v2580 = vpop.f32.mrf.mxu0
    %v2581 = vpop.f32.mrf.mxu0
    %v2582 = vadd.f32 %v2421, %v2581
    %v2583 = vpop.f32.mrf.mxu0
    %2584 = vmatprep.mubr.bf16.mxu0 %v2258
    %2585 = vmatmul.mubr.bf16.gmra.mxu0 %v2257
    %v2586 = vpop.f32.mrf.mxu0
    %v2587 = vadd.f32 %v2426, %v2586
    %v2588 = vpop.f32.mrf.mxu0
    %v2589 = vpop.f32.mrf.mxu0
    %v2590 = vadd.f32 %v2429, %v2589
    %v2591 = vpop.f32.mrf.mxu0
    %2592 = vmatprep.mubr.bf16.mxu0 %v2262
    %2593 = vmatmul.mubr.bf16.gmra.mxu0 %v2261
    %v2594 = vpop.f32.mrf.mxu0
    %v2595 = vadd.f32 %v2434, %v2594
    %v2596 = vpop.f32.mrf.mxu0
    %v2597 = vpop.f32.mrf.mxu0
    %v2598 = vadd.f32 %v2437, %v2597
    %v2599 = vpop.f32.mrf.mxu0
    %2600 = vmatprep.mubr.bf16.mxu0 %v2266
    %2601 = vmatmul.mubr.bf16.gmra.mxu0 %v2265
    %v2602 = vpop.f32.mrf.mxu0
    %v2603 = vadd.f32 %v2442, %v2602
    %v2604 = vpop.f32.mrf.mxu0
    %v2605 = vpop.f32.mrf.mxu0
    %v2606 = vadd.f32 %v2445, %v2605
    %v2607 = vpop.f32.mrf.mxu0
    %2608 = vmatprep.mubr.bf16.mxu0 %v2270
    %2609 = vmatmul.mubr.bf16.gmra.mxu0 %v2269
    %v2610 = vpop.f32.mrf.mxu0
    %v2611 = vadd.f32 %v2450, %v2610
    %v2612 = vpop.f32.mrf.mxu0
    %v2613 = vpop.f32.mrf.mxu0
    %v2614 = vadd.f32 %v2453, %v2613
    %v2615 = vpop.f32.mrf.mxu0
    %2616 = vmatprep.mubr.bf16.mxu0 %v2274
    %2617 = vmatmul.mubr.bf16.gmra.mxu0 %v2273
    %v2618 = vpop.f32.mrf.mxu0
    %v2619 = vadd.f32 %v2458, %v2618
    %v2620 = vpop.f32.mrf.mxu0
    %v2621 = vpop.f32.mrf.mxu0
    %v2622 = vadd.f32 %v2461, %v2621
    %v2623 = vpop.f32.mrf.mxu0
    %2624 = vmatprep.mubr.bf16.mxu0 %v2278
    %2625 = vmatmul.mubr.bf16.gmra.mxu0 %v2277
    %v2626 = vpop.f32.mrf.mxu0
    %v2627 = vadd.f32 %v2466, %v2626
    %v2628 = vpop.f32.mrf.mxu0
    %v2629 = vpop.f32.mrf.mxu0
    %v2630 = vadd.f32 %v2469, %v2629
    %v2631 = vpop.f32.mrf.mxu0
    %2632 = vmatprep.mubr.bf16.mxu0 %v2282
    %2633 = vmatmul.mubr.bf16.gmra.mxu0 %v2281
    %v2634 = vpop.f32.mrf.mxu0
    %v2635 = vadd.f32 %v2474, %v2634
    %v2636 = vpop.f32.mrf.mxu0
    %v2637 = vpop.f32.mrf.mxu0
    %v2638 = vadd.f32 %v2477, %v2637
    %v2639 = vpop.f32.mrf.mxu0
    %2640 = vmatprep.mubr.bf16.mxu0 %v2286
    %2641 = vmatmul.mubr.bf16.gmra.mxu0 %v2285
    %v2642 = vpop.f32.mrf.mxu0
    %v2643 = vadd.f32 %v2482, %v2642
    %v2644 = vpop.f32.mrf.mxu0
    %v2645 = vpop.f32.mrf.mxu0
    %v2646 = vadd.f32 %v2485, %v2645
    %v2647 = vpop.f32.mrf.mxu0
    %2648 = vmatprep.mubr.bf16.mxu0 %v2290
    %2649 = vmatmul.mubr.bf16.gmra.mxu0 %v2289
    %v2650 = vpop.f32.mrf.mxu0
    %v2651 = vadd.f32 %v2490, %v2650
    %v2652 = vpop.f32.mrf.mxu0
    %v2653 = vpop.f32.mrf.mxu0
    %v2654 = vadd.f32 %v2493, %v2653
    %v2655 = vpop.f32.mrf.mxu0
    %2656 = vmatprep.mubr.bf16.mxu0 %v2294
    %2657 = vmatmul.mubr.bf16.gmra.mxu0 %v2293
    %v2658 = vpop.f32.mrf.mxu0
    %v2659 = vadd.f32 %v2498, %v2658
    %v2660 = vpop.f32.mrf.mxu0
    %v2661 = vpop.f32.mrf.mxu0
    %v2662 = vadd.f32 %v2501, %v2661
    %v2663 = vpop.f32.mrf.mxu0
    %2664 = vmatprep.mubr.bf16.mxu0 %v2298
    %2665 = vmatmul.mubr.bf16.gmra.mxu0 %v2297
    %v2666 = vpop.f32.mrf.mxu0
    %v2667 = vadd.f32 %v2506, %v2666
    %v2668 = vpop.f32.mrf.mxu0
    %v2669 = vpop.f32.mrf.mxu0
    %v2670 = vadd.f32 %v2509, %v2669
    %v2671 = vpop.f32.mrf.mxu0
    %2672 = vmatprep.mubr.bf16.mxu0 %v2302
    %2673 = vmatmul.mubr.bf16.gmra.mxu0 %v2301
    %v2674 = vpop.f32.mrf.mxu0
    %v2675 = vadd.f32 %v2514, %v2674
    %v2676 = vpop.f32.mrf.mxu0
    %v2677 = vpop.f32.mrf.mxu0
    %v2678 = vadd.f32 %v2517, %v2677
    %v2679 = vpop.f32.mrf.mxu0
    %2680 = vmatprep.mubr.bf16.mxu0 %v2306
    %2681 = vmatmul.mubr.bf16.gmra.mxu0 %v2305
    %v2682 = vpop.f32.mrf.mxu0
    %v2683 = vadd.f32 %v2522, %v2682
    %v2684 = vpop.f32.mrf.mxu0
    %v2685 = vpop.f32.mrf.mxu0
    %v2686 = vadd.f32 %v2525, %v2685
    %v2687 = vpop.f32.mrf.mxu0
    %2688 = vmatprep.mubr.bf16.mxu0 %v2310
    %2689 = vmatmul.mubr.bf16.gmra.mxu0 %v2309
    %v2690 = vpop.f32.mrf.mxu0
    %v2691 = vadd.f32 %v2530, %v2690
    %v2692 = vpop.f32.mrf.mxu0
    %v2693 = vpop.f32.mrf.mxu0
    %v2694 = vadd.f32 %v2533, %v2693
    %v2695 = vpop.f32.mrf.mxu0
    %2696 = vdwg.mxu0
    %v2697 = vmax.f32 %v2571, 0.0
    %v2698 = vmax.f32 %v2574, 0.0
    %v2699 = vmax.f32 %v2579, 0.0
    %v2700 = vmax.f32 %v2582, 0.0
    %v2701 = vmax.f32 %v2587, 0.0
    %v2702 = vmax.f32 %v2590, 0.0
    %v2703 = vmax.f32 %v2595, 0.0
    %v2704 = vmax.f32 %v2598, 0.0
    %v2705 = vmax.f32 %v2603, 0.0
    %v2706 = vmax.f32 %v2606, 0.0
    %v2707 = vmax.f32 %v2611, 0.0
    %v2708 = vmax.f32 %v2614, 0.0
    %v2709 = vmax.f32 %v2619, 0.0
    %v2710 = vmax.f32 %v2622, 0.0
    %v2711 = vmax.f32 %v2627, 0.0
    %v2712 = vmax.f32 %v2630, 0.0
    %v2713 = vmax.f32 %v2635, 0.0
    %v2714 = vmax.f32 %v2638, 0.0
    %v2715 = vmax.f32 %v2643, 0.0
    %v2716 = vmax.f32 %v2646, 0.0
    %v2717 = vmax.f32 %v2651, 0.0
    %v2718 = vmax.f32 %v2654, 0.0
    %v2719 = vmax.f32 %v2659, 0.0
    %v2720 = vmax.f32 %v2662, 0.0
    %v2721 = vmax.f32 %v2667, 0.0
    %v2722 = vmax.f32 %v2670, 0.0
    %v2723 = vmax.f32 %v2675, 0.0
    %v2724 = vmax.f32 %v2678, 0.0
    %v2725 = vmax.f32 %v2683, 0.0
    %v2726 = vmax.f32 %v2686, 0.0
    %v2727 = vmax.f32 %v2691, 0.0
    %v2728 = vmax.f32 %v2694, 0.0
    %v2729 = vld [vmem:[%s7] sm:$0xff]
    %v2730 = vld [vmem:[%s7 + $0x8] sm:$0xff]
    %v2731 = vld [vmem:[%s7 + $0x10] sm:$0xff]
    %v2732 = vld [vmem:[%s7 + $0x18] sm:$0xff]
    %v2733 = vld [vmem:[%s7 + $0x20] sm:$0xff]
    %v2734 = vld [vmem:[%s7 + $0x28] sm:$0xff]
    %v2735 = vld [vmem:[%s7 + $0x30] sm:$0xff]
    %v2736 = vld [vmem:[%s7 + $0x38] sm:$0xff]
    %v2737 = vld [vmem:[%s7 + $0x40] sm:$0xff]
    %v2738 = vld [vmem:[%s7 + $0x48] sm:$0xff]
    %v2739 = vld [vmem:[%s7 + $0x50] sm:$0xff]
    %v2740 = vld [vmem:[%s7 + $0x58] sm:$0xff]
    %v2741 = vld [vmem:[%s7 + $0x60] sm:$0xff]
    %v2742 = vld [vmem:[%s7 + $0x68] sm:$0xff]
    %v2743 = vld [vmem:[%s7 + $0x70] sm:$0xff]
    %v2744 = vld [vmem:[%s7 + $0x78] sm:$0xff]
    %v2745 = vld [vmem:[%s7 + $0x80] sm:$0xff]
    %v2746 = vld [vmem:[%s7 + $0x88] sm:$0xff]
    %v2747 = vld [vmem:[%s7 + $0x90] sm:$0xff]
    %v2748 = vld [vmem:[%s7 + $0x98] sm:$0xff]
    %v2749 = vld [vmem:[%s7 + $0xa0] sm:$0xff]
    %v2750 = vld [vmem:[%s7 + $0xa8] sm:$0xff]
    %v2751 = vld [vmem:[%s7 + $0xb0] sm:$0xff]
    %v2752 = vld [vmem:[%s7 + $0xb8] sm:$0xff]
    %v2753 = vld [vmem:[%s7 + $0xc0] sm:$0xff]
    %v2754 = vld [vmem:[%s7 + $0xc8] sm:$0xff]
    %v2755 = vld [vmem:[%s7 + $0xd0] sm:$0xff]
    %v2756 = vld [vmem:[%s7 + $0xd8] sm:$0xff]
    %v2757 = vld [vmem:[%s7 + $0xe0] sm:$0xff]
    %v2758 = vld [vmem:[%s7 + $0xe8] sm:$0xff]
    %v2759 = vld [vmem:[%s7 + $0xf0] sm:$0xff]
    %v2760 = vld [vmem:[%s7 + $0xf8] sm:$0xff]
    %2762 = vset.pattern.permute.xlu0 0
    %2763 = vperm.xlu0 %2762, %v2729
    %v2764 = vpop.permute.xlu0 %2763
    %2767 = vset.pattern.permute.xlu0 0
    %2768 = vperm.xlu0 %2767, %v2730
    %v2769 = vpop.permute.xlu0 %2768
    %2772 = vset.pattern.permute.xlu0 0
    %2773 = vperm.xlu0 %2772, %v2731
    %v2774 = vpop.permute.xlu0 %2773
    %2777 = vset.pattern.permute.xlu0 0
    %2778 = vperm.xlu0 %2777, %v2732
    %v2779 = vpop.permute.xlu0 %2778
    %2782 = vset.pattern.permute.xlu0 0
    %2783 = vperm.xlu0 %2782, %v2733
    %v2784 = vpop.permute.xlu0 %2783
    %2787 = vset.pattern.permute.xlu0 0
    %2788 = vperm.xlu0 %2787, %v2734
    %v2789 = vpop.permute.xlu0 %2788
    %2792 = vset.pattern.permute.xlu0 0
    %2793 = vperm.xlu0 %2792, %v2735
    %v2794 = vpop.permute.xlu0 %2793
    %2797 = vset.pattern.permute.xlu0 0
    %2798 = vperm.xlu0 %2797, %v2736
    %v2799 = vpop.permute.xlu0 %2798
    %2802 = vset.pattern.permute.xlu0 0
    %2803 = vperm.xlu0 %2802, %v2737
    %v2804 = vpop.permute.xlu0 %2803
    %2807 = vset.pattern.permute.xlu0 0
    %2808 = vperm.xlu0 %2807, %v2738
    %v2809 = vpop.permute.xlu0 %2808
    %2812 = vset.pattern.permute.xlu0 0
    %2813 = vperm.xlu0 %2812, %v2739
    %v2814 = vpop.permute.xlu0 %2813
    %2817 = vset.pattern.permute.xlu0 0
    %2818 = vperm.xlu0 %2817, %v2740
    %v2819 = vpop.permute.xlu0 %2818
    %2822 = vset.pattern.permute.xlu0 0
    %2823 = vperm.xlu0 %2822, %v2741
    %v2824 = vpop.permute.xlu0 %2823
    %2827 = vset.pattern.permute.xlu0 0
    %2828 = vperm.xlu0 %2827, %v2742
    %v2829 = vpop.permute.xlu0 %2828
    %2832 = vset.pattern.permute.xlu0 0
    %2833 = vperm.xlu0 %2832, %v2743
    %v2834 = vpop.permute.xlu0 %2833
    %2837 = vset.pattern.permute.xlu0 0
    %2838 = vperm.xlu0 %2837, %v2744
    %v2839 = vpop.permute.xlu0 %2838
    %2842 = vset.pattern.permute.xlu0 0
    %2843 = vperm.xlu0 %2842, %v2745
    %v2844 = vpop.permute.xlu0 %2843
    %2847 = vset.pattern.permute.xlu0 0
    %2848 = vperm.xlu0 %2847, %v2746
    %v2849 = vpop.permute.xlu0 %2848
    %2852 = vset.pattern.permute.xlu0 0
    %2853 = vperm.xlu0 %2852, %v2747
    %v2854 = vpop.permute.xlu0 %2853
    %2857 = vset.pattern.permute.xlu0 0
    %2858 = vperm.xlu0 %2857, %v2748
    %v2859 = vpop.permute.xlu0 %2858
    %2862 = vset.pattern.permute.xlu0 0
    %2863 = vperm.xlu0 %2862, %v2749
    %v2864 = vpop.permute.xlu0 %2863
    %2867 = vset.pattern.permute.xlu0 0
    %2868 = vperm.xlu0 %2867, %v2750
    %v2869 = vpop.permute.xlu0 %2868
    %2872 = vset.pattern.permute.xlu0 0
    %2873 = vperm.xlu0 %2872, %v2751
    %v2874 = vpop.permute.xlu0 %2873
    %2877 = vset.pattern.permute.xlu0 0
    %2878 = vperm.xlu0 %2877, %v2752
    %v2879 = vpop.permute.xlu0 %2878
    %2882 = vset.pattern.permute.xlu0 0
    %2883 = vperm.xlu0 %2882, %v2753
    %v2884 = vpop.permute.xlu0 %2883
    %2887 = vset.pattern.permute.xlu0 0
    %2888 = vperm.xlu0 %2887, %v2754
    %v2889 = vpop.permute.xlu0 %2888
    %2892 = vset.pattern.permute.xlu0 0
    %2893 = vperm.xlu0 %2892, %v2755
    %v2894 = vpop.permute.xlu0 %2893
    %2897 = vset.pattern.permute.xlu0 0
    %2898 = vperm.xlu0 %2897, %v2756
    %v2899 = vpop.permute.xlu0 %2898
    %2902 = vset.pattern.permute.xlu0 0
    %2903 = vperm.xlu0 %2902, %v2757
    %v2904 = vpop.permute.xlu0 %2903
    %2907 = vset.pattern.permute.xlu0 0
    %2908 = vperm.xlu0 %2907, %v2758
    %v2909 = vpop.permute.xlu0 %2908
    %2912 = vset.pattern.permute.xlu0 0
    %2913 = vperm.xlu0 %2912, %v2759
    %v2914 = vpop.permute.xlu0 %2913
    %2917 = vset.pattern.permute.xlu0 0
    %2918 = vperm.xlu0 %2917, %v2760
    %v2919 = vpop.permute.xlu0 %2918
    %v2921 = vmul.f32 %v2697, %v2764
    %v2922 = vmul.f32 %v2698, %v2769
    %v2923 = vmul.f32 %v2699, %v2774
    %v2924 = vmul.f32 %v2700, %v2779
    %v2925 = vmul.f32 %v2701, %v2784
    %v2926 = vmul.f32 %v2702, %v2789
    %v2927 = vmul.f32 %v2703, %v2794
    %v2928 = vmul.f32 %v2704, %v2799
    %v2929 = vmul.f32 %v2705, %v2804
    %v2930 = vmul.f32 %v2706, %v2809
    %v2931 = vmul.f32 %v2707, %v2814
    %v2932 = vmul.f32 %v2708, %v2819
    %v2933 = vmul.f32 %v2709, %v2824
    %v2934 = vmul.f32 %v2710, %v2829
    %v2935 = vmul.f32 %v2711, %v2834
    %v2936 = vmul.f32 %v2712, %v2839
    %v2937 = vmul.f32 %v2713, %v2844
    %v2938 = vmul.f32 %v2714, %v2849
    %v2939 = vmul.f32 %v2715, %v2854
    %v2940 = vmul.f32 %v2716, %v2859
    %v2941 = vmul.f32 %v2717, %v2864
    %v2942 = vmul.f32 %v2718, %v2869
    %v2943 = vmul.f32 %v2719, %v2874
    %v2944 = vmul.f32 %v2720, %v2879
    %v2945 = vmul.f32 %v2721, %v2884
    %v2946 = vmul.f32 %v2722, %v2889
    %v2947 = vmul.f32 %v2723, %v2894
    %v2948 = vmul.f32 %v2724, %v2899
    %v2949 = vmul.f32 %v2725, %v2904
    %v2950 = vmul.f32 %v2726, %v2909
    %v2951 = vmul.f32 %v2727, %v2914
    %v2952 = vmul.f32 %v2728, %v2919
    %v2953 = vadd.f32 %v2921, %v2922
    %v2954 = vadd.f32 %v2953, %v2923
    %v2955 = vadd.f32 %v2954, %v2924
    %v2956 = vadd.f32 %v2955, %v2925
    %v2957 = vadd.f32 %v2956, %v2926
    %v2958 = vadd.f32 %v2957, %v2927
    %v2959 = vadd.f32 %v2958, %v2928
    %v2960 = vadd.f32 %v2959, %v2929
    %v2961 = vadd.f32 %v2960, %v2930
    %v2962 = vadd.f32 %v2961, %v2931
    %v2963 = vadd.f32 %v2962, %v2932
    %v2964 = vadd.f32 %v2963, %v2933
    %v2965 = vadd.f32 %v2964, %v2934
    %v2966 = vadd.f32 %v2965, %v2935
    %v2967 = vadd.f32 %v2966, %v2936
    %v2968 = vadd.f32 %v2967, %v2937
    %v2969 = vadd.f32 %v2968, %v2938
    %v2970 = vadd.f32 %v2969, %v2939
    %v2971 = vadd.f32 %v2970, %v2940
    %v2972 = vadd.f32 %v2971, %v2941
    %v2973 = vadd.f32 %v2972, %v2942
    %v2974 = vadd.f32 %v2973, %v2943
    %v2975 = vadd.f32 %v2974, %v2944
    %v2976 = vadd.f32 %v2975, %v2945
    %v2977 = vadd.f32 %v2976, %v2946
    %v2978 = vadd.f32 %v2977, %v2947
    %v2979 = vadd.f32 %v2978, %v2948
    %v2980 = vadd.f32 %v2979, %v2949
    %v2981 = vadd.f32 %v2980, %v2950
    %v2982 = vadd.f32 %v2981, %v2951
    %v2983 = vadd.f32 %v2982, %v2952
    %v2984 = vrot.slane %v2983, 4
    %v2985 = vadd.f32 %v2983, %v2984
    %v2986 = vrot.slane %v2985, 2
    %v2987 = vadd.f32 %v2985, %v2986
    %v2988 = vrot.slane %v2987, 1
    %v2989 = vadd.f32 %v2987, %v2988
    %v2990 = vld [vmem:[#allocation2] sm:$0x1]
    %2992 = vset.pattern.permute.xlu0 0
    %2993 = vperm.xlu0 %2992, %v2990
    %v2994 = vpop.permute.xlu0 %2993
    %v2996 = vlaneseq
    %v2997 = vshrl.u32 %v2996, 7
    %v2998 = vsub.s32 0, %v2997
    %v2999 = vrot.slane %v2994, %v2998
    %v3000 = vadd.f32 %v2989, %v2999
    %v3001 = vsub.f32 0.0, %v3000
    %v3002 = vmul.f32 %v3001, 1.442695
    %v3003 = vpow.pop %v3002
    %v3004 = vadd.f32 %v3003, 1.0
    %v3005 = vrcp.pop %v3004
    %3006 = vst [vmem:[#allocation3] sm:$0x1] %v3005
    // Predicated region
    $region38: #{tpu_custom_call.1} parent=1 // pred_check
      _
    $region39: #{tpu_custom_call.1} parent=1 // pred_check_branch
      %3008 = sbr.rel (0) target = $region41
    $region40: #{tpu_custom_call.1} parent=1 // pred_region
      %s3010 = ssub.s32 16, 16
      %3011 = vsyncadd [#allocation4], %s3010
      %s3013 = sshll.u32 [#allocation3], 4
      %s3014 = int_to_ptr.vmem [resolvable:$true] %s3013
      %3016 = dma.vmem_to_hbm [thread:$0]  %s3014, 16, %s9, [#allocation4]
    $region41: #{tpu_custom_call.1} parent=1 // pred_fallthru
      _
    // Predicated region
    $region42: #{tpu_custom_call.1} parent=1 // pred_check
      _
    $region43: #{tpu_custom_call.1} parent=1 // pred_check_branch
      %3018 = sbr.rel (0) target = $region45
    $region44: #{tpu_custom_call.1} parent=1 // pred_region
      %3019 = dma.done [#allocation4], 16
    $region45: #{tpu_custom_call.1} parent=1 // pred_fallthru
      _
    %3020 = vsyncpa [#allocation4], 1

</llo_original>
